<compile_context>
chip_gen: v6e
topology: v6e:2x2x1
jax: 0.10.0
libtpu: 0.0.40
codegen_flags: <defaults>
</compile_context>

<pallas_src>
import functools

import numpy as np
import jax
import jax.numpy as jnp
from jax.experimental import pallas as pl
from jax.experimental.pallas import tpu as pltpu

EXPANSION = 4
BN_EPS = 1e-5
LANE = 128


def _round_up(v, m):
    return ((v + m - 1) // m) * m


def _bottleneck_kernel(W, x_ref, xt_ref, xb_ref,
                       w1_ref, b1_ref, w2_ref, b2_ref, w3_ref, b3_ref,
                       o_ref, patch_ref):
    rb = pl.program_id(1)
    n_rb = pl.num_programs(1)
    M = x_ref.shape[1]                 # rows_per_block * W (flattened)
    P_pad = w1_ref.shape[1]            # planes padded to a multiple of 128

    # ---- conv1 (1x1) + folded bn1 + relu (main rows + 2 halo rows) --------
    w1 = w1_ref[...]
    b1 = b1_ref[...]

    def conv1(x_bf16):
        h = jnp.dot(x_bf16, w1, preferred_element_type=jnp.float32)
        return jnp.maximum(h + b1, 0.0)

    h1 = conv1(x_ref[0])               # (M, P_pad) f32
    h1_top = conv1(xt_ref[0])          # (W, P_pad)  image row above the block
    h1_bot = conv1(xb_ref[0])          # (W, P_pad)  image row below the block
    # conv2's zero padding acts on h1: zero the halo rows at the image border.
    h1_top = h1_top * jnp.where(rb == 0, 0.0, 1.0)
    h1_bot = h1_bot * jnp.where(rb == n_rb - 1, 0.0, 1.0)

    # ---- conv2 (3x3, pad=1, stride=1) via lane-aligned im2col --------------
    # Row-padded slab in flattened (row-major, width W) coordinates; it starts
    # at an image-row boundary so column ids are simply (slab row) % W.
    pad_c = jnp.concatenate([h1_top, h1, h1_bot], axis=0)        # (M+2W, P_pad)
    zrow = jnp.zeros((1, P_pad), jnp.float32)
    col = jax.lax.broadcasted_iota(jnp.int32, (M + 2 * W, 1), 0) % W
    # dx = -1 / +1 shifted copies, built once (single +-1 row shift each,
    # column wrap masked); all tap reads below are W-aligned static slices.
    pad_l = jnp.where(col > 0,
                      jnp.concatenate([zrow, pad_c[:-1, :]], axis=0), 0.0)
    pad_r = jnp.where(col < W - 1,
                      jnp.concatenate([pad_c[1:, :], zrow], axis=0), 0.0)
    taps = (pad_l, pad_c, pad_r)       # kw = 0, 1, 2  (dx = -1, 0, +1)

    # 128-lane-aligned patch stores: tap t occupies columns [t*P_pad,(t+1)*P_pad)
    for kh in range(3):                # dy = kh - 1  -> W-aligned row offset
        base = kh * W
        for kw in range(3):
            t = kh * 3 + kw
            patch_ref[:, t * P_pad:(t + 1) * P_pad] = (
                taps[kw][base:base + M, :].astype(jnp.bfloat16))

    h2 = jnp.dot(patch_ref[...], w2_ref[...],        # (M,9P_pad) x (9P_pad,P_pad)
                 preferred_element_type=jnp.float32)
    h2 = jnp.maximum(h2 + b2_ref[...], 0.0)

    # ---- conv3 (1x1) + folded bn3 + residual add + relu --------------------
    h3 = jnp.dot(h2.astype(jnp.bfloat16), w3_ref[...],
                 preferred_element_type=jnp.float32)             # (M, Cout)
    res = x_ref[0].astype(jnp.float32)   # re-read the VMEM-resident input block
    o_ref[0] = jnp.maximum(h3 + b3_ref[...] + res, 0.0).astype(o_ref.dtype)


def _pick_rows_per_block(H, W, target_rows=512):
    """Largest divisor of H keeping ~<=512 flattened rows per block."""
    best = 1
    for r in range(1, H + 1):
        if H % r == 0 and r * W <= target_rows:
            best = r
    return best


def _vmem_limit_bytes(M, W, Cin, P_pad, Cout):
    bf, f32 = 2, 4
    est = (2 * (M + 2 * W) * Cin * bf          # double-buffered input blocks
           + 2 * M * Cout * bf                 # double-buffered output blocks
           + 2 * (Cin * P_pad + 9 * P_pad * P_pad + P_pad * Cout + 3 * P_pad) * f32
           + M * 9 * P_pad * bf                # im2col patch scratch
           + 3 * (M + 2 * W) * P_pad * f32     # pad_c / pad_l / pad_r values
           + 2 * M * P_pad * f32               # h1 / h2 f32 values
           + 2 * M * Cout * f32)               # h3 / out f32 values
    return int(min(max(2 * est, 32 * 2 ** 20), 56 * 2 ** 20))


def bottleneck_pallas_nhwc(x_nhwc, params, rows_per_block=None):
    """NHWC-native entry point.  HBM I/O is bf16; accumulation stays f32."""
    N, H, W, Cin = x_nhwc.shape
    P_pad = params["w1"].shape[1]
    Cout = params["w3"].shape[1]
    assert Cout == Cin, "identity residual requires inplanes == planes * expansion"

    if rows_per_block is None:
        rows_per_block = _pick_rows_per_block(H, W)
    assert H % rows_per_block == 0
    n_rb = H // rows_per_block
    M = rows_per_block * W
    HW = H * W
    r_blk = rows_per_block

    # bf16 HBM I/O (flattened spatial dim: free reshape, NHWC is HW-major).
    x2 = x_nhwc.reshape(N, HW, Cin).astype(jnp.bfloat16)

    kernel = functools.partial(_bottleneck_kernel, W)

    in_specs = [
        # main rows of this spatial block
        pl.BlockSpec((1, M, Cin), lambda b, rb: (b, rb, 0)),
        # 1-row top / bottom halo (index clamped at the border, masked in-kernel)
        pl.BlockSpec((1, W, Cin),
                     lambda b, rb: (b, jnp.maximum(rb * r_blk - 1, 0), 0)),
        pl.BlockSpec((1, W, Cin),
                     lambda b, rb: (b, jnp.minimum((rb + 1) * r_blk, H - 1), 0)),
        pl.BlockSpec((Cin, P_pad), lambda b, rb: (0, 0)),         # w1 (bn1 folded)
        pl.BlockSpec((1, P_pad), lambda b, rb: (0, 0)),           # b1
        pl.BlockSpec((9 * P_pad, P_pad), lambda b, rb: (0, 0)),   # w2 im2col (bn2 folded)
        pl.BlockSpec((1, P_pad), lambda b, rb: (0, 0)),           # b2
        pl.BlockSpec((P_pad, Cout), lambda b, rb: (0, 0)),        # w3 (bn3 folded)
        pl.BlockSpec((1, Cout), lambda b, rb: (0, 0)),            # b3
    ]
    out_spec = pl.BlockSpec((1, M, Cout), lambda b, rb: (b, rb, 0))

    out2 = pl.pallas_call(
        kernel,
        out_shape=jax.ShapeDtypeStruct((N, HW, Cout), jnp.bfloat16),
        grid=(N, n_rb),
        in_specs=in_specs,
        out_specs=out_spec,
        scratch_shapes=[pltpu.VMEM((M, 9 * P_pad), jnp.bfloat16)],  # im2col patch
        compiler_params=pltpu.CompilerParams(
            dimension_semantics=("parallel", "parallel"),
            vmem_limit_bytes=_vmem_limit_bytes(M, W, Cin, P_pad, Cout)),
    )(x2, x2, x2,
      params["w1"], params["b1"], params["w2"], params["b2"],
      params["w3"], params["b3"])

    return out2.reshape(N, H, W, Cout)


def bottleneck_pallas(x_nchw, params, rows_per_block=None):
    """NCHW shim matching the PyTorch module interface (f32 in / f32 out)."""
    x_nhwc = jnp.transpose(x_nchw, (0, 2, 3, 1))
    out_nhwc = bottleneck_pallas_nhwc(x_nhwc, params, rows_per_block)
    return jnp.transpose(out_nhwc.astype(jnp.float32), (0, 3, 1, 2))


# ------------------------ parameter setup (glue) ---------------------------

def make_params(key, inplanes, planes):
    """Synthetic weights in PyTorch conventions, then BN-folded / lane-padded."""
    ks = jax.random.split(key, 15)
    out3 = planes * EXPANSION
    p_pad = _round_up(planes, LANE)

    w1_oihw = 0.1 * jax.random.normal(ks[0], (planes, inplanes, 1, 1), jnp.float32)
    w2_oihw = 0.1 * jax.random.normal(ks[1], (planes, planes, 3, 3), jnp.float32)
    w3_oihw = 0.1 * jax.random.normal(ks[2], (out3, planes, 1, 1), jnp.float32)

    def bn_params(kg, kb, km, kv, c):
        gamma = 1.0 + 0.1 * jax.random.normal(kg, (c,), jnp.float32)
        beta = 0.1 * jax.random.normal(kb, (c,), jnp.float32)
        mean = 0.1 * jax.random.normal(km, (c,), jnp.float32)
        var = jax.random.uniform(kv, (c,), jnp.float32, 0.5, 1.5)
        return gamma, beta, mean, var

    bn1 = bn_params(ks[3], ks[4], ks[5], ks[6], planes)
    bn2 = bn_params(ks[7], ks[8], ks[9], ks[10], planes)
    bn3 = bn_params(ks[11], ks[12], ks[13], ks[14], out3)

    def fold(bn):
        gamma, beta, mean, var = bn
        scale = gamma / jnp.sqrt(var + BN_EPS)
        return scale, beta - mean * scale

    s1, b1 = fold(bn1)
    s2, b2 = fold(bn2)
    s3, b3 = fold(bn3)

    # BN scales folded into the conv weights; hidden width lane-padded to 128.
    w1_mat = jnp.transpose(w1_oihw[:, :, 0, 0], (1, 0)) * s1[None, :]       # (Cin, P)
    w1_k = jnp.zeros((inplanes, p_pad), jnp.float32).at[:, :planes].set(w1_mat)
    b1_k = jnp.zeros((1, p_pad), jnp.float32).at[0, :planes].set(b1)

    w2_hwio = jnp.transpose(w2_oihw, (2, 3, 1, 0)) * s2[None, None, None, :]  # (3,3,P,P)
    w2_pad = jnp.zeros((3, 3, p_pad, p_pad), jnp.float32)
    w2_pad = w2_pad.at[:, :, :planes, :planes].set(w2_hwio)
    w2_k = w2_pad.reshape(9 * p_pad, p_pad)
    b2_k = jnp.zeros((1, p_pad), jnp.float32).at[0, :planes].set(b2)

    w3_mat = jnp.transpose(w3_oihw[:, :, 0, 0], (1, 0)) * s3[None, :]        # (P, Cout)
    w3_k = jnp.zeros((p_pad, out3), jnp.float32).at[:planes, :].set(w3_mat)
    b3_k = b3.reshape(1, out3)

    return dict(
        w1=w1_k.astype(jnp.bfloat16), b1=b1_k,
        w2=w2_k.astype(jnp.bfloat16), b2=b2_k,
        w3=w3_k.astype(jnp.bfloat16), b3=b3_k,
        # PyTorch-layout originals for the f32 reference
        w1_oihw=w1_oihw, w2_oihw=w2_oihw, w3_oihw=w3_oihw,
        bn1=bn1, bn2=bn2, bn3=bn3,
    )


def bottleneck_ref(x_nchw, params):
    """Pure-JAX reference matching PyTorch (eval-mode BN), full f32."""
    dn = ("NCHW", "OIHW", "NCHW")
    conv = lambda x, w, pad: jax.lax.conv_general_dilated(
        x, w, (1, 1), pad, dimension_numbers=dn,
        precision=jax.lax.Precision.HIGHEST)

    def bn(x, p):
        gamma, beta, mean, var = p
        inv = gamma / jnp.sqrt(var + BN_EPS)
        return x * inv[None, :, None, None] + (beta - mean * inv)[None, :, None, None]

    out = jax.nn.relu(bn(conv(x_nchw, params["w1_oihw"], "VALID"), params["bn1"]))
    out = jax.nn.relu(bn(conv(out, params["w2_oihw"], ((1, 1), (1, 1))), params["bn2"]))
    out = bn(conv(out, params["w3_oihw"], "VALID"), params["bn3"])
    return jax.nn.relu(out + x_nchw)


if __name__ == "__main__":
    key = jax.random.PRNGKey(0)
    k_x, k_p = jax.random.split(key)

    planes = 4
    inplanes = planes * EXPANSION          # 16, so identity residual is valid
    N, H, W = 2, 16, 16

    x = jax.random.normal(k_x, (N, inplanes, H, W), jnp.float32)
    params = make_params(k_p, inplanes, planes)

    ref = jax.block_until_ready(bottleneck_ref(x, params))

    # Module-interface (NCHW) path; 4 row blocks per image exercises the halo.
    out = jax.block_until_ready(bottleneck_pallas(x, params, rows_per_block=4))
    np.testing.assert_allclose(np.asarray(out), np.asarray(ref),
                               rtol=3e-2, atol=3e-2)   # bf16 HBM I/O tolerance

    # NHWC-native path with auto row blocking (single block per image here).
    x_nhwc = jnp.transpose(x, (0, 2, 3, 1))
    out_nhwc = jax.block_until_ready(bottleneck_pallas_nhwc(x_nhwc, params))
    np.testing.assert_allclose(
        np.asarray(jnp.transpose(out_nhwc.astype(jnp.float32), (0, 3, 1, 2))),
        np.asarray(ref), rtol=3e-2, atol=3e-2)

    print("KERNEL_OK")
</pallas_src>

<mosaic_0001>
module attributes {stable_mosaic.version = 11 : i64} {
  func.func @_bottleneck_kernel(%arg0: i32, %arg1: i32, %arg2: memref<1x64x16xbf16, #tpu.memory_space<vmem>>, %arg3: memref<1x16x16xbf16, #tpu.memory_space<vmem>>, %arg4: memref<1x16x16xbf16, #tpu.memory_space<vmem>>, %arg5: memref<16x128xbf16, #tpu.memory_space<vmem>>, %arg6: memref<1x128xf32, #tpu.memory_space<vmem>>, %arg7: memref<1152x128xbf16, #tpu.memory_space<vmem>>, %arg8: memref<1x128xf32, #tpu.memory_space<vmem>>, %arg9: memref<128x16xbf16, #tpu.memory_space<vmem>>, %arg10: memref<1x16xf32, #tpu.memory_space<vmem>>, %arg11: memref<1x64x16xbf16, #tpu.memory_space<vmem>>, %arg12: memref<64x1152xbf16, #tpu.memory_space<vmem>>) attributes {dimension_semantics = [#tpu.dimension_semantics<parallel>, #tpu.dimension_semantics<parallel>], iteration_bounds = array<i64: 2, 4>, scalar_prefetch = 0 : i64, scratch_operands = 1 : i64, tpu.core_type = #tpu.core_type<tc>, window_params = [{transform_indices = @transform_0, window_bounds = array<i64: 1, 64, 16>}, {transform_indices = @transform_1, window_bounds = array<i64: 1, 16, 16>}, {transform_indices = @transform_2, window_bounds = array<i64: 1, 16, 16>}, {pipeline_mode = #tpu.pipeline_mode<synchronous>, transform_indices = @transform_3, window_bounds = array<i64: 16, 128>}, {pipeline_mode = #tpu.pipeline_mode<synchronous>, transform_indices = @transform_4, window_bounds = array<i64: 1, 128>}, {pipeline_mode = #tpu.pipeline_mode<synchronous>, transform_indices = @transform_5, window_bounds = array<i64: 1152, 128>}, {pipeline_mode = #tpu.pipeline_mode<synchronous>, transform_indices = @transform_6, window_bounds = array<i64: 1, 128>}, {pipeline_mode = #tpu.pipeline_mode<synchronous>, transform_indices = @transform_7, window_bounds = array<i64: 128, 16>}, {pipeline_mode = #tpu.pipeline_mode<synchronous>, transform_indices = @transform_8, window_bounds = array<i64: 1, 16>}, {transform_indices = @transform_9, window_bounds = array<i64: 1, 64, 16>}]} {
    %c0 = arith.constant 0 : index
    %c0_0 = arith.constant 0 : index
    %0 = vector.load %arg5[%c0, %c0_0] : memref<16x128xbf16, #tpu.memory_space<vmem>>, vector<16x128xbf16>
    %c0_1 = arith.constant 0 : index
    %c0_2 = arith.constant 0 : index
    %1 = vector.load %arg6[%c0_1, %c0_2] : memref<1x128xf32, #tpu.memory_space<vmem>>, vector<1x128xf32>
    %c0_3 = arith.constant 0 : index
    %c0_4 = arith.constant 0 : index
    %c0_5 = arith.constant 0 : index
    %2 = vector.load %arg2[%c0_3, %c0_4, %c0_5] : memref<1x64x16xbf16, #tpu.memory_space<vmem>>, vector<1x64x16xbf16>
    %3 = vector.shape_cast %2 : vector<1x64x16xbf16> to vector<64x16xbf16>
    %cst = arith.constant dense<0.000000e+00> : vector<64x128xf32>
    %4 = tpu.matmul %3, %0, %cst {dimension_numbers = #tpu.dot_dimension_numbers<[1], [0], [0], [1], [0, 0, 1, 1], [], []>} : vector<64x16xbf16>, vector<16x128xbf16>, vector<64x128xf32> -> vector<64x128xf32>
    %5 = vector.broadcast %1 : vector<1x128xf32> to vector<64x128xf32>
    %6 = arith.addf %4, %5 : vector<64x128xf32>
    %cst_6 = arith.constant 0.000000e+00 : f32
    %7 = vector.broadcast %cst_6 : f32 to vector<64x128xf32>
    %8 = arith.maximumf %6, %7 : vector<64x128xf32>
    %c0_7 = arith.constant 0 : index
    %c0_8 = arith.constant 0 : index
    %c0_9 = arith.constant 0 : index
    %9 = vector.load %arg3[%c0_7, %c0_8, %c0_9] : memref<1x16x16xbf16, #tpu.memory_space<vmem>>, vector<1x16x16xbf16>
    %10 = vector.shape_cast %9 : vector<1x16x16xbf16> to vector<16x16xbf16>
    %cst_10 = arith.constant dense<0.000000e+00> : vector<16x128xf32>
    %11 = tpu.matmul %10, %0, %cst_10 {dimension_numbers = #tpu.dot_dimension_numbers<[1], [0], [0], [1], [0, 0, 1, 1], [], []>} : vector<16x16xbf16>, vector<16x128xbf16>, vector<16x128xf32> -> vector<16x128xf32>
    %12 = vector.broadcast %1 : vector<1x128xf32> to vector<16x128xf32>
    %13 = arith.addf %11, %12 : vector<16x128xf32>
    %cst_11 = arith.constant 0.000000e+00 : f32
    %14 = vector.broadcast %cst_11 : f32 to vector<16x128xf32>
    %15 = arith.maximumf %13, %14 : vector<16x128xf32>
    %c0_12 = arith.constant 0 : index
    %c0_13 = arith.constant 0 : index
    %c0_14 = arith.constant 0 : index
    %16 = vector.load %arg4[%c0_12, %c0_13, %c0_14] : memref<1x16x16xbf16, #tpu.memory_space<vmem>>, vector<1x16x16xbf16>
    %17 = vector.shape_cast %16 : vector<1x16x16xbf16> to vector<16x16xbf16>
    %cst_15 = arith.constant dense<0.000000e+00> : vector<16x128xf32>
    %18 = tpu.matmul %17, %0, %cst_15 {dimension_numbers = #tpu.dot_dimension_numbers<[1], [0], [0], [1], [0, 0, 1, 1], [], []>} : vector<16x16xbf16>, vector<16x128xbf16>, vector<16x128xf32> -> vector<16x128xf32>
    %19 = vector.broadcast %1 : vector<1x128xf32> to vector<16x128xf32>
    %20 = arith.addf %18, %19 : vector<16x128xf32>
    %cst_16 = arith.constant 0.000000e+00 : f32
    %21 = vector.broadcast %cst_16 : f32 to vector<16x128xf32>
    %22 = arith.maximumf %20, %21 : vector<16x128xf32>
    %c0_i32 = arith.constant 0 : i32
    %23 = arith.cmpi eq, %arg1, %c0_i32 : i32
    %cst_17 = arith.constant 0.000000e+00 : f32
    %cst_18 = arith.constant 1.000000e+00 : f32
    %24 = arith.select %23, %cst_17, %cst_18 : f32
    %25 = vector.broadcast %24 : f32 to vector<16x128xf32>
    %26 = arith.mulf %15, %25 : vector<16x128xf32>
    %c3_i32 = arith.constant 3 : i32
    %27 = arith.cmpi eq, %arg1, %c3_i32 : i32
    %cst_19 = arith.constant 0.000000e+00 : f32
    %cst_20 = arith.constant 1.000000e+00 : f32
    %28 = arith.select %27, %cst_19, %cst_20 : f32
    %29 = vector.broadcast %28 : f32 to vector<16x128xf32>
    %30 = arith.mulf %22, %29 : vector<16x128xf32>
    %31 = tpu.concatenate %26, %8, %30 in 0 : vector<16x128xf32>, vector<64x128xf32>, vector<16x128xf32> -> vector<96x128xf32>
    %cst_21 = arith.constant 0.000000e+00 : f32
    %32 = vector.broadcast %cst_21 : f32 to vector<1x128xf32>
    %33 = tpu.iota {dimensions = array<i32: 0>} : vector<96x1xi32>
    %c16_i32 = arith.constant 16 : i32
    %c0_i32_22 = arith.constant 0 : i32
    %34 = arith.cmpi eq, %c16_i32, %c0_i32_22 : i32
    %c1_i32 = arith.constant 1 : i32
    %35 = arith.select %34, %c1_i32, %c16_i32 : i32
    %36 = vector.broadcast %35 : i32 to vector<96x1xi32>
    %37 = arith.remsi %33, %36 : vector<96x1xi32>
    %c0_i32_23 = arith.constant 0 : i32
    %38 = vector.broadcast %c0_i32_23 : i32 to vector<96x1xi32>
    %39 = arith.cmpi ne, %37, %38 : vector<96x1xi32>
    %c0_i32_24 = arith.constant 0 : i32
    %40 = vector.broadcast %c0_i32_24 : i32 to vector<96x1xi32>
    %41 = arith.cmpi slt, %37, %40 : vector<96x1xi32>
    %c0_i32_25 = arith.constant 0 : i32
    %42 = arith.cmpi slt, %35, %c0_i32_25 : i32
    %43 = vector.broadcast %42 : i1 to vector<96x1xi1>
    %44 = vector.broadcast %43 : vector<96x1xi1> to vector<96x1xi1>
    %45 = arith.xori %41, %44 : vector<96x1xi1>
    %46 = arith.andi %45, %39 : vector<96x1xi1>
    %47 = vector.broadcast %35 : i32 to vector<96x1xi32>
    %48 = arith.addi %37, %47 : vector<96x1xi32>
    %49 = arith.select %46, %48, %37 : vector<96x1xi1>, vector<96x1xi32>
    %c0_i32_26 = arith.constant 0 : i32
    %50 = vector.broadcast %c0_i32_26 : i32 to vector<96x1xi32>
    %51 = arith.cmpi sgt, %49, %50 : vector<96x1xi32>
    %52 = vector.extract_strided_slice %31 {offsets = [0, 0], sizes = [95, 128], strides = [1, 1]} : vector<96x128xf32> to vector<95x128xf32>
    %53 = tpu.concatenate %32, %52 in 0 : vector<1x128xf32>, vector<95x128xf32> -> vector<96x128xf32>
    %cst_27 = arith.constant 0.000000e+00 : f32
    %54 = vector.shape_cast %51 : vector<96x1xi1> to vector<96x1xi1>
    %55 = vector.broadcast %54 : vector<96x1xi1> to vector<96x128xi1>
    %56 = vector.broadcast %cst_27 : f32 to vector<96x128xf32>
    %57 = arith.select %55, %53, %56 : vector<96x128xi1>, vector<96x128xf32>
    %c15_i32 = arith.constant 15 : i32
    %58 = vector.broadcast %c15_i32 : i32 to vector<96x1xi32>
    %59 = arith.cmpi slt, %49, %58 : vector<96x1xi32>
    %60 = vector.extract_strided_slice %31 {offsets = [1, 0], sizes = [95, 128], strides = [1, 1]} : vector<96x128xf32> to vector<95x128xf32>
    %61 = tpu.concatenate %60, %32 in 0 : vector<95x128xf32>, vector<1x128xf32> -> vector<96x128xf32>
    %cst_28 = arith.constant 0.000000e+00 : f32
    %62 = vector.shape_cast %59 : vector<96x1xi1> to vector<96x1xi1>
    %63 = vector.broadcast %62 : vector<96x1xi1> to vector<96x128xi1>
    %64 = vector.broadcast %cst_28 : f32 to vector<96x128xf32>
    %65 = arith.select %63, %61, %64 : vector<96x128xi1>, vector<96x128xf32>
    %66 = vector.extract_strided_slice %57 {offsets = [0, 0], sizes = [64, 128], strides = [1, 1]} : vector<96x128xf32> to vector<64x128xf32>
    %67 = arith.truncf %66 : vector<64x128xf32> to vector<64x128xbf16>
    %c0_29 = arith.constant 0 : index
    %c0_30 = arith.constant 0 : index
    %68 = vector.load %arg12[%c0_29, %c0_30] : memref<64x1152xbf16, #tpu.memory_space<vmem>>, vector<64x128xbf16>
    tpu.vector_store %arg12[%c0_29, %c0_30], %67 {strides = array<i32>} : memref<64x1152xbf16, #tpu.memory_space<vmem>>, vector<64x128xbf16>,
    %69 = vector.extract_strided_slice %31 {offsets = [0, 0], sizes = [64, 128], strides = [1, 1]} : vector<96x128xf32> to vector<64x128xf32>
    %70 = arith.truncf %69 : vector<64x128xf32> to vector<64x128xbf16>
    %c0_31 = arith.constant 0 : index
    %c128 = arith.constant 128 : index
    %71 = vector.load %arg12[%c0_31, %c128] : memref<64x1152xbf16, #tpu.memory_space<vmem>>, vector<64x128xbf16>
    tpu.vector_store %arg12[%c0_31, %c128], %70 {strides = array<i32>} : memref<64x1152xbf16, #tpu.memory_space<vmem>>, vector<64x128xbf16>,
    %72 = vector.extract_strided_slice %65 {offsets = [0, 0], sizes = [64, 128], strides = [1, 1]} : vector<96x128xf32> to vector<64x128xf32>
    %73 = arith.truncf %72 : vector<64x128xf32> to vector<64x128xbf16>
    %c0_32 = arith.constant 0 : index
    %c256 = arith.constant 256 : index
    %74 = vector.load %arg12[%c0_32, %c256] : memref<64x1152xbf16, #tpu.memory_space<vmem>>, vector<64x128xbf16>
    tpu.vector_store %arg12[%c0_32, %c256], %73 {strides = array<i32>} : memref<64x1152xbf16, #tpu.memory_space<vmem>>, vector<64x128xbf16>,
    %75 = vector.extract_strided_slice %57 {offsets = [16, 0], sizes = [64, 128], strides = [1, 1]} : vector<96x128xf32> to vector<64x128xf32>
    %76 = arith.truncf %75 : vector<64x128xf32> to vector<64x128xbf16>
    %c0_33 = arith.constant 0 : index
    %c384 = arith.constant 384 : index
    %77 = vector.load %arg12[%c0_33, %c384] : memref<64x1152xbf16, #tpu.memory_space<vmem>>, vector<64x128xbf16>
    tpu.vector_store %arg12[%c0_33, %c384], %76 {strides = array<i32>} : memref<64x1152xbf16, #tpu.memory_space<vmem>>, vector<64x128xbf16>,
    %78 = vector.extract_strided_slice %31 {offsets = [16, 0], sizes = [64, 128], strides = [1, 1]} : vector<96x128xf32> to vector<64x128xf32>
    %79 = arith.truncf %78 : vector<64x128xf32> to vector<64x128xbf16>
    %c0_34 = arith.constant 0 : index
    %c512 = arith.constant 512 : index
    %80 = vector.load %arg12[%c0_34, %c512] : memref<64x1152xbf16, #tpu.memory_space<vmem>>, vector<64x128xbf16>
    tpu.vector_store %arg12[%c0_34, %c512], %79 {strides = array<i32>} : memref<64x1152xbf16, #tpu.memory_space<vmem>>, vector<64x128xbf16>,
    %81 = vector.extract_strided_slice %65 {offsets = [16, 0], sizes = [64, 128], strides = [1, 1]} : vector<96x128xf32> to vector<64x128xf32>
    %82 = arith.truncf %81 : vector<64x128xf32> to vector<64x128xbf16>
    %c0_35 = arith.constant 0 : index
    %c640 = arith.constant 640 : index
    %83 = vector.load %arg12[%c0_35, %c640] : memref<64x1152xbf16, #tpu.memory_space<vmem>>, vector<64x128xbf16>
    tpu.vector_store %arg12[%c0_35, %c640], %82 {strides = array<i32>} : memref<64x1152xbf16, #tpu.memory_space<vmem>>, vector<64x128xbf16>,
    %84 = vector.extract_strided_slice %57 {offsets = [32, 0], sizes = [64, 128], strides = [1, 1]} : vector<96x128xf32> to vector<64x128xf32>
    %85 = arith.truncf %84 : vector<64x128xf32> to vector<64x128xbf16>
    %c0_36 = arith.constant 0 : index
    %c768 = arith.constant 768 : index
    %86 = vector.load %arg12[%c0_36, %c768] : memref<64x1152xbf16, #tpu.memory_space<vmem>>, vector<64x128xbf16>
    tpu.vector_store %arg12[%c0_36, %c768], %85 {strides = array<i32>} : memref<64x1152xbf16, #tpu.memory_space<vmem>>, vector<64x128xbf16>,
    %87 = vector.extract_strided_slice %31 {offsets = [32, 0], sizes = [64, 128], strides = [1, 1]} : vector<96x128xf32> to vector<64x128xf32>
    %88 = arith.truncf %87 : vector<64x128xf32> to vector<64x128xbf16>
    %c0_37 = arith.constant 0 : index
    %c896 = arith.constant 896 : index
    %89 = vector.load %arg12[%c0_37, %c896] : memref<64x1152xbf16, #tpu.memory_space<vmem>>, vector<64x128xbf16>
    tpu.vector_store %arg12[%c0_37, %c896], %88 {strides = array<i32>} : memref<64x1152xbf16, #tpu.memory_space<vmem>>, vector<64x128xbf16>,
    %90 = vector.extract_strided_slice %65 {offsets = [32, 0], sizes = [64, 128], strides = [1, 1]} : vector<96x128xf32> to vector<64x128xf32>
    %91 = arith.truncf %90 : vector<64x128xf32> to vector<64x128xbf16>
    %c0_38 = arith.constant 0 : index
    %c1024 = arith.constant 1024 : index
    %92 = vector.load %arg12[%c0_38, %c1024] : memref<64x1152xbf16, #tpu.memory_space<vmem>>, vector<64x128xbf16>
    tpu.vector_store %arg12[%c0_38, %c1024], %91 {strides = array<i32>} : memref<64x1152xbf16, #tpu.memory_space<vmem>>, vector<64x128xbf16>,
    %c0_39 = arith.constant 0 : index
    %c0_40 = arith.constant 0 : index
    %93 = vector.load %arg12[%c0_39, %c0_40] : memref<64x1152xbf16, #tpu.memory_space<vmem>>, vector<64x1152xbf16>
    %c0_41 = arith.constant 0 : index
    %c0_42 = arith.constant 0 : index
    %94 = vector.load %arg7[%c0_41, %c0_42] : memref<1152x128xbf16, #tpu.memory_space<vmem>>, vector<1152x128xbf16>
    %cst_43 = arith.constant dense<0.000000e+00> : vector<64x128xf32>
    %95 = tpu.matmul %93, %94, %cst_43 {dimension_numbers = #tpu.dot_dimension_numbers<[1], [0], [0], [1], [0, 0, 1, 1], [], []>} : vector<64x1152xbf16>, vector<1152x128xbf16>, vector<64x128xf32> -> vector<64x128xf32>
    %c0_44 = arith.constant 0 : index
    %c0_45 = arith.constant 0 : index
    %96 = vector.load %arg8[%c0_44, %c0_45] : memref<1x128xf32, #tpu.memory_space<vmem>>, vector<1x128xf32>
    %97 = vector.broadcast %96 : vector<1x128xf32> to vector<64x128xf32>
    %98 = arith.addf %95, %97 : vector<64x128xf32>
    %cst_46 = arith.constant 0.000000e+00 : f32
    %99 = vector.broadcast %cst_46 : f32 to vector<64x128xf32>
    %100 = arith.maximumf %98, %99 : vector<64x128xf32>
    %101 = arith.truncf %100 : vector<64x128xf32> to vector<64x128xbf16>
    %c0_47 = arith.constant 0 : index
    %c0_48 = arith.constant 0 : index
    %102 = vector.load %arg9[%c0_47, %c0_48] : memref<128x16xbf16, #tpu.memory_space<vmem>>, vector<128x16xbf16>
    %cst_49 = arith.constant dense<0.000000e+00> : vector<64x16xf32>
    %103 = tpu.matmul %101, %102, %cst_49 {dimension_numbers = #tpu.dot_dimension_numbers<[1], [0], [0], [1], [0, 0, 1, 1], [], []>} : vector<64x128xbf16>, vector<128x16xbf16>, vector<64x16xf32> -> vector<64x16xf32>
    %c0_50 = arith.constant 0 : index
    %c0_51 = arith.constant 0 : index
    %c0_52 = arith.constant 0 : index
    %104 = vector.load %arg2[%c0_50, %c0_51, %c0_52] : memref<1x64x16xbf16, #tpu.memory_space<vmem>>, vector<1x64x16xbf16>
    %105 = vector.shape_cast %104 : vector<1x64x16xbf16> to vector<64x16xbf16>
    %106 = arith.extf %105 : vector<64x16xbf16> to vector<64x16xf32>
    %c0_53 = arith.constant 0 : index
    %c0_54 = arith.constant 0 : index
    %107 = vector.load %arg10[%c0_53, %c0_54] : memref<1x16xf32, #tpu.memory_space<vmem>>, vector<1x16xf32>
    %108 = vector.broadcast %107 : vector<1x16xf32> to vector<64x16xf32>
    %109 = arith.addf %103, %108 : vector<64x16xf32>
    %110 = arith.addf %109, %106 : vector<64x16xf32>
    %cst_55 = arith.constant 0.000000e+00 : f32
    %111 = vector.broadcast %cst_55 : f32 to vector<64x16xf32>
    %112 = arith.maximumf %110, %111 : vector<64x16xf32>
    %113 = arith.truncf %112 : vector<64x16xf32> to vector<64x16xbf16>
    %c0_56 = arith.constant 0 : index
    %c0_57 = arith.constant 0 : index
    %c0_58 = arith.constant 0 : index
    %114 = vector.load %arg11[%c0_56, %c0_57, %c0_58] : memref<1x64x16xbf16, #tpu.memory_space<vmem>>, vector<1x64x16xbf16>
    %115 = vector.shape_cast %114 : vector<1x64x16xbf16> to vector<64x16xbf16>
    %116 = vector.shape_cast %113 : vector<64x16xbf16> to vector<1x64x16xbf16>
    tpu.vector_store %arg11[%c0_56, %c0_57, %c0_58], %116 {strides = array<i32>} : memref<1x64x16xbf16, #tpu.memory_space<vmem>>, vector<1x64x16xbf16>,
    return
  }
  func.func @transform_0(%arg0: i32, %arg1: i32) -> (i32, i32, i32) {
    %c0_i32 = arith.constant 0 : i32
    %c0_i32_0 = arith.constant 0 : i32
    return %arg0, %arg1, %c0_i32 : i32, i32, i32
  }
  func.func @transform_1(%arg0: i32, %arg1: i32) -> (i32, i32, i32) {
    %c4_i32 = arith.constant 4 : i32
    %0 = arith.muli %arg1, %c4_i32 : i32
    %c1_i32 = arith.constant 1 : i32
    %1 = arith.subi %0, %c1_i32 : i32
    %c0_i32 = arith.constant 0 : i32
    %2 = arith.maxsi %1, %c0_i32 : i32
    %c0_i32_0 = arith.constant 0 : i32
    %c0_i32_1 = arith.constant 0 : i32
    return %arg0, %2, %c0_i32_0 : i32, i32, i32
  }
  func.func @transform_2(%arg0: i32, %arg1: i32) -> (i32, i32, i32) {
    %c1_i32 = arith.constant 1 : i32
    %0 = arith.addi %arg1, %c1_i32 : i32
    %c4_i32 = arith.constant 4 : i32
    %1 = arith.muli %0, %c4_i32 : i32
    %c15_i32 = arith.constant 15 : i32
    %2 = arith.minsi %1, %c15_i32 : i32
    %c0_i32 = arith.constant 0 : i32
    %c0_i32_0 = arith.constant 0 : i32
    return %arg0, %2, %c0_i32 : i32, i32, i32
  }
  func.func @transform_3(%arg0: i32, %arg1: i32) -> (i32, i32) {
    %c0_i32 = arith.constant 0 : i32
    %c0_i32_0 = arith.constant 0 : i32
    %c0_i32_1 = arith.constant 0 : i32
    return %c0_i32, %c0_i32_0 : i32, i32
  }
  func.func @transform_4(%arg0: i32, %arg1: i32) -> (i32, i32) {
    %c0_i32 = arith.constant 0 : i32
    %c0_i32_0 = arith.constant 0 : i32
    %c0_i32_1 = arith.constant 0 : i32
    return %c0_i32, %c0_i32_0 : i32, i32
  }
  func.func @transform_5(%arg0: i32, %arg1: i32) -> (i32, i32) {
    %c0_i32 = arith.constant 0 : i32
    %c0_i32_0 = arith.constant 0 : i32
    %c0_i32_1 = arith.constant 0 : i32
    return %c0_i32, %c0_i32_0 : i32, i32
  }
  func.func @transform_6(%arg0: i32, %arg1: i32) -> (i32, i32) {
    %c0_i32 = arith.constant 0 : i32
    %c0_i32_0 = arith.constant 0 : i32
    %c0_i32_1 = arith.constant 0 : i32
    return %c0_i32, %c0_i32_0 : i32, i32
  }
  func.func @transform_7(%arg0: i32, %arg1: i32) -> (i32, i32) {
    %c0_i32 = arith.constant 0 : i32
    %c0_i32_0 = arith.constant 0 : i32
    %c0_i32_1 = arith.constant 0 : i32
    return %c0_i32, %c0_i32_0 : i32, i32
  }
  func.func @transform_8(%arg0: i32, %arg1: i32) -> (i32, i32) {
    %c0_i32 = arith.constant 0 : i32
    %c0_i32_0 = arith.constant 0 : i32
    %c0_i32_1 = arith.constant 0 : i32
    return %c0_i32, %c0_i32_0 : i32, i32
  }
  func.func @transform_9(%arg0: i32, %arg1: i32) -> (i32, i32, i32) {
    %c0_i32 = arith.constant 0 : i32
    %c0_i32_0 = arith.constant 0 : i32
    return %arg0, %arg1, %c0_i32 : i32, i32, i32
  }
}

</mosaic_0001>

<llo_original>
// kernel: tpu_custom_call.1
$region0: #{tpu_custom_call.1}
  #allocation0 [shape = 'u32[]', space=smem, size = 0x4, offset = 0x4, fixed_abs, tag = 'smem constant byte address 0x4 - core index']
  #allocation1 [shape = 'u32[144,128]{1,0:T(1,128)}', space=vmem, size = 0x12000, scoped, tag = 'internal scratch']
  #allocation2 [shape = 'bf16[64,1152]{1,0:T(8,128)(2,1)}', space=vmem, size = 0x24000, scoped, tag = 'scratch operand']
  %s0 = inlined_call_operand.vmem [shape: bf16[2,256,16], index: 0, kind: input, shape index: {}]
  %s1 = inlined_call_operand.vmem [shape: bf16[2,256,16], index: 1, kind: input, shape index: {}]
  %s2 = inlined_call_operand.vmem [shape: bf16[2,256,16], index: 2, kind: input, shape index: {}]
  %s3 = inlined_call_operand.vmem [shape: bf16[16,128], index: 3, kind: input, shape index: {}]
  %s4 = inlined_call_operand.vmem [shape: f32[1,128], index: 4, kind: input, shape index: {}]
  %s5 = inlined_call_operand.vmem [shape: bf16[1152,128], index: 5, kind: input, shape index: {}]
  %s6 = inlined_call_operand.vmem [shape: f32[1,128], index: 6, kind: input, shape index: {}]
  %s7 = inlined_call_operand.vmem [shape: bf16[128,16], index: 7, kind: input, shape index: {}]
  %s8 = inlined_call_operand.vmem [shape: f32[1,16], index: 8, kind: input, shape index: {}]
  %s9 = inlined_call_operand.vmem [shape: bf16[2,256,16], index: 9, kind: output, shape index: {}]
  %s10 = sld [smem:[#allocation0]]
  $region69: #{tpu_custom_call.1} parent=0
    _
  %s12 = ssub.s32 1, %s10
  %s13 = scalar_select 0, %s12, %s10
  loop: start=0, step=1, limit=10
  $region2: #{tpu_custom_call.1} parent=0 // loop_pre_header
    _
  $region3: #{tpu_custom_call.1} parent=0 // loop_header
    %s15 = sphi 0, %s19
    %p16 = scmp.ge.s32.totalorder %s15, 10
    %s22 = sphi 0, %s34
    %s23 = sphi 0, %s30
    %s24 = sphi 0, %s22
    %s25 = sphi 0, %s23
    %s26 = sphi 0, %s24
    %s27 = sphi 0, %s25
    %s39 = sphi 0, %s41
    %s42 = sphi 0, %s39
    %s43 = sphi 0, %s42
    %s59 = sphi 0, %s43
    %s75 = sphi 0, %s77
    %s78 = sphi 0, %s75
    %s79 = sphi 0, %s78
    %s95 = sphi 0, %s79
    %s111 = sphi 0, %s113
    %s114 = sphi 0, %s111
    %s115 = sphi 0, %s114
    %s131 = sphi 0, %s115
    %s135 = sphi 0, %s135
    %s137 = sphi 0, %s135
    %s138 = sphi 0, %s137
    %s152 = sphi 0, %s138
    %s156 = sphi 0, %s156
    %s158 = sphi 0, %s156
    %s159 = sphi 0, %s158
    %s173 = sphi 0, %s159
    %s177 = sphi 0, %s177
    %s179 = sphi 0, %s177
    %s180 = sphi 0, %s179
    %s194 = sphi 0, %s180
    %s198 = sphi 0, %s198
    %s200 = sphi 0, %s198
    %s201 = sphi 0, %s200
    %s215 = sphi 0, %s201
    %s219 = sphi 0, %s219
    %s221 = sphi 0, %s219
    %s222 = sphi 0, %s221
    %s236 = sphi 0, %s222
    %s240 = sphi 0, %s240
    %s242 = sphi 0, %s240
    %s243 = sphi 0, %s242
    %s257 = sphi 0, %s243
    %s265 = sphi 0, %s267
    %s268 = sphi 0, %s265
    %s269 = sphi 0, %s268
    %s285 = sphi 0, %s269
  $region4: #{tpu_custom_call.1} parent=0 // loop_header_branch
    %18 = sbr.rel (%p16) target = $region8
  $region5: #{tpu_custom_call.1} parent=0 // loop_body
    %s20 = ssub.s32 %s15, 1
    %s21 = ssub.s32 %s15, 2
    %s28 = sadd.s32 1, %s23
    %p29 = scmp.ge.s32.totalorder %s28, 4
    %s30 = scalar_select %p29, 0, %s28
    %s31 = sadd.s32 1, %s22
    %s32 = scalar_select %p29, %s31, %s22
    %p33 = scmp.ge.s32.totalorder %s32, 2
    %s34 = scalar_select %p33, 0, %s32
    %s35 = ssub.s32 %s22, %s34
    %s36 = ssub.s32 %s23, %s30
    %s37 = sor.u32 %s35, %s36
    %p38 = scmp.eq.s32.totalorder %s37, 0
    %s40 = sadd.s32 %s39, 1
    %s41 = scalar_select %p38, %s39, %s40
    %p44 = pneg %p38
    %p45 = scmp.eq.s32.totalorder %s15, 7
    %p46 = por %p44, %p45
    %p47 = scmp.ne.s32.totalorder %s39, %s42
    %p48 = scmp.eq.s32.totalorder %s15, 0
    %p49 = por %p47, %p48
    %p50 = scmp.ne.s32.totalorder %s39, %s42
    %p51 = scmp.eq.s32.totalorder %s20, 7
    %p52 = por %p50, %p51
    %p53 = scmp.ne.s32.totalorder %s42, %s43
    %p54 = scmp.eq.s32.totalorder %s20, 0
    %p55 = por %p53, %p54
    %p56 = scmp.ne.s32.totalorder %s42, %s43
    %p57 = scmp.eq.s32.totalorder %s21, 7
    %p58 = por %p56, %p57
    %p60 = scmp.ne.s32.totalorder %s43, %s59
    %p61 = scmp.eq.s32.totalorder %s21, 0
    %p62 = por %p60, %p61
    %s63 = smul.u32 %s23, 4
    %s64 = ssub.s32 %s63, 1
    %p65 = scmp.gt.s32.totalorder %s64, 0
    %s66 = scalar_select %p65, %s64, 0
    %s67 = smul.u32 %s30, 4
    %s68 = ssub.s32 %s67, 1
    %p69 = scmp.gt.s32.totalorder %s68, 0
    %s70 = scalar_select %p69, %s68, 0
    %s71 = ssub.s32 %s22, %s34
    %s72 = ssub.s32 %s66, %s70
    %s73 = sor.u32 %s71, %s72
    %p74 = scmp.eq.s32.totalorder %s73, 0
    %s76 = sadd.s32 %s75, 1
    %s77 = scalar_select %p74, %s75, %s76
    %p80 = pneg %p74
    %p81 = scmp.eq.s32.totalorder %s15, 7
    %p82 = por %p80, %p81
    %p83 = scmp.ne.s32.totalorder %s75, %s78
    %p84 = scmp.eq.s32.totalorder %s15, 0
    %p85 = por %p83, %p84
    %p86 = scmp.ne.s32.totalorder %s75, %s78
    %p87 = scmp.eq.s32.totalorder %s20, 7
    %p88 = por %p86, %p87
    %p89 = scmp.ne.s32.totalorder %s78, %s79
    %p90 = scmp.eq.s32.totalorder %s20, 0
    %p91 = por %p89, %p90
    %p92 = scmp.ne.s32.totalorder %s78, %s79
    %p93 = scmp.eq.s32.totalorder %s21, 7
    %p94 = por %p92, %p93
    %p96 = scmp.ne.s32.totalorder %s79, %s95
    %p97 = scmp.eq.s32.totalorder %s21, 0
    %p98 = por %p96, %p97
    %s99 = sadd.s32 %s23, 1
    %s100 = smul.u32 %s99, 4
    %p101 = scmp.lt.s32.totalorder %s100, 15
    %s102 = scalar_select %p101, %s100, 15
    %s103 = sadd.s32 %s30, 1
    %s104 = smul.u32 %s103, 4
    %p105 = scmp.lt.s32.totalorder %s104, 15
    %s106 = scalar_select %p105, %s104, 15
    %s107 = ssub.s32 %s22, %s34
    %s108 = ssub.s32 %s102, %s106
    %s109 = sor.u32 %s107, %s108
    %p110 = scmp.eq.s32.totalorder %s109, 0
    %s112 = sadd.s32 %s111, 1
    %s113 = scalar_select %p110, %s111, %s112
    %p116 = pneg %p110
    %p117 = scmp.eq.s32.totalorder %s15, 7
    %p118 = por %p116, %p117
    %p119 = scmp.ne.s32.totalorder %s111, %s114
    %p120 = scmp.eq.s32.totalorder %s15, 0
    %p121 = por %p119, %p120
    %p122 = scmp.ne.s32.totalorder %s111, %s114
    %p123 = scmp.eq.s32.totalorder %s20, 7
    %p124 = por %p122, %p123
    %p125 = scmp.ne.s32.totalorder %s114, %s115
    %p126 = scmp.eq.s32.totalorder %s20, 0
    %p127 = por %p125, %p126
    %p128 = scmp.ne.s32.totalorder %s114, %s115
    %p129 = scmp.eq.s32.totalorder %s21, 7
    %p130 = por %p128, %p129
    %p132 = scmp.ne.s32.totalorder %s115, %s131
    %p133 = scmp.eq.s32.totalorder %s21, 0
    %p134 = por %p132, %p133
    %s136 = sadd.s32 %s135, 1
    %p139 = scmp.eq.s32.totalorder %s15, 7
    %p140 = scmp.ne.s32.totalorder %s135, %s137
    %p141 = scmp.eq.s32.totalorder %s15, 0
    %p142 = por %p140, %p141
    %p143 = scmp.ne.s32.totalorder %s135, %s137
    %p144 = scmp.eq.s32.totalorder %s20, 7
    %p145 = por %p143, %p144
    %p146 = scmp.ne.s32.totalorder %s137, %s138
    %p147 = scmp.eq.s32.totalorder %s20, 0
    %p148 = por %p146, %p147
    %p149 = scmp.ne.s32.totalorder %s137, %s138
    %p150 = scmp.eq.s32.totalorder %s21, 7
    %p151 = por %p149, %p150
    %p153 = scmp.ne.s32.totalorder %s138, %s152
    %p154 = scmp.eq.s32.totalorder %s21, 0
    %p155 = por %p153, %p154
    %s157 = sadd.s32 %s156, 1
    %p160 = scmp.eq.s32.totalorder %s15, 7
    %p161 = scmp.ne.s32.totalorder %s156, %s158
    %p162 = scmp.eq.s32.totalorder %s15, 0
    %p163 = por %p161, %p162
    %p164 = scmp.ne.s32.totalorder %s156, %s158
    %p165 = scmp.eq.s32.totalorder %s20, 7
    %p166 = por %p164, %p165
    %p167 = scmp.ne.s32.totalorder %s158, %s159
    %p168 = scmp.eq.s32.totalorder %s20, 0
    %p169 = por %p167, %p168
    %p170 = scmp.ne.s32.totalorder %s158, %s159
    %p171 = scmp.eq.s32.totalorder %s21, 7
    %p172 = por %p170, %p171
    %p174 = scmp.ne.s32.totalorder %s159, %s173
    %p175 = scmp.eq.s32.totalorder %s21, 0
    %p176 = por %p174, %p175
    %s178 = sadd.s32 %s177, 1
    %p181 = scmp.eq.s32.totalorder %s15, 7
    %p182 = scmp.ne.s32.totalorder %s177, %s179
    %p183 = scmp.eq.s32.totalorder %s15, 0
    %p184 = por %p182, %p183
    %p185 = scmp.ne.s32.totalorder %s177, %s179
    %p186 = scmp.eq.s32.totalorder %s20, 7
    %p187 = por %p185, %p186
    %p188 = scmp.ne.s32.totalorder %s179, %s180
    %p189 = scmp.eq.s32.totalorder %s20, 0
    %p190 = por %p188, %p189
    %p191 = scmp.ne.s32.totalorder %s179, %s180
    %p192 = scmp.eq.s32.totalorder %s21, 7
    %p193 = por %p191, %p192
    %p195 = scmp.ne.s32.totalorder %s180, %s194
    %p196 = scmp.eq.s32.totalorder %s21, 0
    %p197 = por %p195, %p196
    %s199 = sadd.s32 %s198, 1
    %p202 = scmp.eq.s32.totalorder %s15, 7
    %p203 = scmp.ne.s32.totalorder %s198, %s200
    %p204 = scmp.eq.s32.totalorder %s15, 0
    %p205 = por %p203, %p204
    %p206 = scmp.ne.s32.totalorder %s198, %s200
    %p207 = scmp.eq.s32.totalorder %s20, 7
    %p208 = por %p206, %p207
    %p209 = scmp.ne.s32.totalorder %s200, %s201
    %p210 = scmp.eq.s32.totalorder %s20, 0
    %p211 = por %p209, %p210
    %p212 = scmp.ne.s32.totalorder %s200, %s201
    %p213 = scmp.eq.s32.totalorder %s21, 7
    %p214 = por %p212, %p213
    %p216 = scmp.ne.s32.totalorder %s201, %s215
    %p217 = scmp.eq.s32.totalorder %s21, 0
    %p218 = por %p216, %p217
    %s220 = sadd.s32 %s219, 1
    %p223 = scmp.eq.s32.totalorder %s15, 7
    %p224 = scmp.ne.s32.totalorder %s219, %s221
    %p225 = scmp.eq.s32.totalorder %s15, 0
    %p226 = por %p224, %p225
    %p227 = scmp.ne.s32.totalorder %s219, %s221
    %p228 = scmp.eq.s32.totalorder %s20, 7
    %p229 = por %p227, %p228
    %p230 = scmp.ne.s32.totalorder %s221, %s222
    %p231 = scmp.eq.s32.totalorder %s20, 0
    %p232 = por %p230, %p231
    %p233 = scmp.ne.s32.totalorder %s221, %s222
    %p234 = scmp.eq.s32.totalorder %s21, 7
    %p235 = por %p233, %p234
    %p237 = scmp.ne.s32.totalorder %s222, %s236
    %p238 = scmp.eq.s32.totalorder %s21, 0
    %p239 = por %p237, %p238
    %s241 = sadd.s32 %s240, 1
    %p244 = scmp.eq.s32.totalorder %s15, 7
    %p245 = scmp.ne.s32.totalorder %s240, %s242
    %p246 = scmp.eq.s32.totalorder %s15, 0
    %p247 = por %p245, %p246
    %p248 = scmp.ne.s32.totalorder %s240, %s242
    %p249 = scmp.eq.s32.totalorder %s20, 7
    %p250 = por %p248, %p249
    %p251 = scmp.ne.s32.totalorder %s242, %s243
    %p252 = scmp.eq.s32.totalorder %s20, 0
    %p253 = por %p251, %p252
    %p254 = scmp.ne.s32.totalorder %s242, %s243
    %p255 = scmp.eq.s32.totalorder %s21, 7
    %p256 = por %p254, %p255
    %p258 = scmp.ne.s32.totalorder %s243, %s257
    %p259 = scmp.eq.s32.totalorder %s21, 0
    %p260 = por %p258, %p259
    %s261 = ssub.s32 %s22, %s34
    %s262 = ssub.s32 %s23, %s30
    %s263 = sor.u32 %s261, %s262
    %p264 = scmp.eq.s32.totalorder %s263, 0
    %s266 = sadd.s32 %s265, 1
    %s267 = scalar_select %p264, %s265, %s266
    %p270 = pneg %p264
    %p271 = scmp.eq.s32.totalorder %s15, 7
    %p272 = por %p270, %p271
    %p273 = scmp.ne.s32.totalorder %s265, %s268
    %p274 = scmp.eq.s32.totalorder %s15, 0
    %p275 = por %p273, %p274
    %p276 = scmp.ne.s32.totalorder %s265, %s268
    %p277 = scmp.eq.s32.totalorder %s20, 7
    %p278 = por %p276, %p277
    %p279 = scmp.ne.s32.totalorder %s268, %s269
    %p280 = scmp.eq.s32.totalorder %s20, 0
    %p281 = por %p279, %p280
    %p282 = scmp.ne.s32.totalorder %s268, %s269
    %p283 = scmp.eq.s32.totalorder %s21, 7
    %p284 = por %p282, %p283
    %p286 = scmp.ne.s32.totalorder %s269, %s285
    %p287 = scmp.eq.s32.totalorder %s21, 0
    %p288 = por %p286, %p287
    %p289 = scmp.le.s32.totalorder 1, %s15
    %p290 = scmp.lt.s32.totalorder %s15, 9
    %p291 = pnand %p289, %p290
    %p292 = pneg %p291
    // Predicated region
    $region9: #{tpu_custom_call.1} parent=5 // pred_check
      _
    $region10: #{tpu_custom_call.1} parent=5 // pred_check_branch
      %294 = sbr.rel (%p291) target = $region12
    $region11: #{tpu_custom_call.1} parent=5 // pred_region
      %s295 = ssub.s32 %s15, 1
      // Predicated region
      $region13: #{tpu_custom_call.1} parent=11 // pred_check
        %p296 = pneg %p148
      $region14: #{tpu_custom_call.1} parent=11 // pred_check_branch
        %298 = sbr.rel (%p296) target = $region16
      $region15: #{tpu_custom_call.1} parent=11 // pred_region
        _
      $region16: #{tpu_custom_call.1} parent=11 // pred_fallthru
        _
      // Predicated region
      $region17: #{tpu_custom_call.1} parent=11 // pred_check
        %p299 = pneg %p169
      $region18: #{tpu_custom_call.1} parent=11 // pred_check_branch
        %301 = sbr.rel (%p299) target = $region20
      $region19: #{tpu_custom_call.1} parent=11 // pred_region
        _
      $region20: #{tpu_custom_call.1} parent=11 // pred_fallthru
        _
      // Predicated region
      $region21: #{tpu_custom_call.1} parent=11 // pred_check
        %p302 = pneg %p190
      $region22: #{tpu_custom_call.1} parent=11 // pred_check_branch
        %304 = sbr.rel (%p302) target = $region24
      $region23: #{tpu_custom_call.1} parent=11 // pred_region
        _
      $region24: #{tpu_custom_call.1} parent=11 // pred_fallthru
        _
      // Predicated region
      $region25: #{tpu_custom_call.1} parent=11 // pred_check
        %p305 = pneg %p211
      $region26: #{tpu_custom_call.1} parent=11 // pred_check_branch
        %307 = sbr.rel (%p305) target = $region28
      $region27: #{tpu_custom_call.1} parent=11 // pred_region
        _
      $region28: #{tpu_custom_call.1} parent=11 // pred_fallthru
        _
      // Predicated region
      $region29: #{tpu_custom_call.1} parent=11 // pred_check
        %p308 = pneg %p232
      $region30: #{tpu_custom_call.1} parent=11 // pred_check_branch
        %310 = sbr.rel (%p308) target = $region32
      $region31: #{tpu_custom_call.1} parent=11 // pred_region
        _
      $region32: #{tpu_custom_call.1} parent=11 // pred_fallthru
        _
      // Predicated region
      $region33: #{tpu_custom_call.1} parent=11 // pred_check
        %p311 = pneg %p253
      $region34: #{tpu_custom_call.1} parent=11 // pred_check_branch
        %313 = sbr.rel (%p311) target = $region36
      $region35: #{tpu_custom_call.1} parent=11 // pred_region
        _
      $region36: #{tpu_custom_call.1} parent=11 // pred_fallthru
        _
    $region12: #{tpu_custom_call.1} parent=5 // pred_fallthru
      _
    %p314 = scmp.lt.s32.totalorder %s15, 8
    // Predicated region
    $region37: #{tpu_custom_call.1} parent=5 // pred_check
      %p315 = pneg %p314
    $region38: #{tpu_custom_call.1} parent=5 // pred_check_branch
      %317 = sbr.rel (%p315) target = $region40
    $region39: #{tpu_custom_call.1} parent=5 // pred_region
      // Predicated region
      $region41: #{tpu_custom_call.1} parent=39 // pred_check
        %p318 = pneg %p49
      $region42: #{tpu_custom_call.1} parent=39 // pred_check_branch
        %320 = sbr.rel (%p318) target = $region44
      $region43: #{tpu_custom_call.1} parent=39 // pred_region
        %s321 = smul.u32 8, %s23
        %p322 = scmp.lt.s32.totalorder %s22, 1
        %s323 = scalar_select %p322, %s22, 1
        %p324 = scmp.lt.s32.totalorder %s321, 31
        %s325 = scalar_select %p324, %s321, 31
        %s326 = smul.addr %s323, 32
        %s327 = sadd.s32 %s325, %s326
        %s328 = smul.addr %s327, 4
        %s329 = scalar_lea.vmem %s0, %s328
        %s330 = smul.u32 8, %s23
      $region44: #{tpu_custom_call.1} parent=39 // pred_fallthru
        _
      // Predicated region
      $region45: #{tpu_custom_call.1} parent=39 // pred_check
        %p331 = pneg %p85
      $region46: #{tpu_custom_call.1} parent=39 // pred_check_branch
        %333 = sbr.rel (%p331) target = $region48
      $region47: #{tpu_custom_call.1} parent=39 // pred_region
        %s334 = smul.u32 %s23, 4
        %s335 = ssub.s32 %s334, 1
        %p336 = scmp.gt.s32.totalorder %s335, 0
        %s337 = scalar_select %p336, %s335, 0
        %s338 = smul.u32 2, %s337
        %p339 = scmp.lt.s32.totalorder %s22, 1
        %s340 = scalar_select %p339, %s22, 1
        %p341 = scmp.lt.s32.totalorder %s338, 31
        %s342 = scalar_select %p341, %s338, 31
        %s343 = smul.addr %s340, 32
        %s344 = sadd.s32 %s342, %s343
        %s345 = smul.addr %s344, 4
        %s346 = scalar_lea.vmem %s1, %s345
        %s347 = smul.u32 %s23, 4
        %s348 = ssub.s32 %s347, 1
        %p349 = scmp.gt.s32.totalorder %s348, 0
        %s350 = scalar_select %p349, %s348, 0
        %s351 = smul.u32 2, %s350
      $region48: #{tpu_custom_call.1} parent=39 // pred_fallthru
        _
      // Predicated region
      $region49: #{tpu_custom_call.1} parent=39 // pred_check
        %p352 = pneg %p121
      $region50: #{tpu_custom_call.1} parent=39 // pred_check_branch
        %354 = sbr.rel (%p352) target = $region52
      $region51: #{tpu_custom_call.1} parent=39 // pred_region
        %s355 = sadd.s32 %s23, 1
        %s356 = smul.u32 %s355, 4
        %p357 = scmp.lt.s32.totalorder %s356, 15
        %s358 = scalar_select %p357, %s356, 15
        %s359 = smul.u32 2, %s358
        %p360 = scmp.lt.s32.totalorder %s22, 1
        %s361 = scalar_select %p360, %s22, 1
        %p362 = scmp.lt.s32.totalorder %s359, 31
        %s363 = scalar_select %p362, %s359, 31
        %s364 = smul.addr %s361, 32
        %s365 = sadd.s32 %s363, %s364
        %s366 = smul.addr %s365, 4
        %s367 = scalar_lea.vmem %s2, %s366
        %s368 = sadd.s32 %s23, 1
        %s369 = smul.u32 %s368, 4
        %p370 = scmp.lt.s32.totalorder %s369, 15
        %s371 = scalar_select %p370, %s369, 15
        %s372 = smul.u32 2, %s371
      $region52: #{tpu_custom_call.1} parent=39 // pred_fallthru
        _
    $region40: #{tpu_custom_call.1} parent=5 // pred_fallthru
      _
    %p373 = scmp.le.s32.totalorder 1, %s15
    %p374 = scmp.lt.s32.totalorder %s15, 9
    %p375 = pnand %p373, %p374
    %p376 = pneg %p375
    // Predicated region
    $region53: #{tpu_custom_call.1} parent=5 // pred_check
      _
    $region54: #{tpu_custom_call.1} parent=5 // pred_check_branch
      %378 = sbr.rel (%p375) target = $region56
    $region55: #{tpu_custom_call.1} parent=5 // pred_region
      %s379 = ssub.s32 %s15, 1
      %s380 = smul.u32 8, %s25
      %p381 = scmp.lt.s32.totalorder %s24, 1
      %s382 = scalar_select %p381, %s24, 1
      %p383 = scmp.lt.s32.totalorder %s380, 31
      %s384 = scalar_select %p383, %s380, 31
      %s385 = smul.addr %s382, 32
      %s386 = sadd.s32 %s384, %s385
      %s387 = smul.addr %s386, 4
      %s388 = scalar_lea.vmem %s0, %s387
      %p389 = pneg %p55
      %p390 = pneg %p52
      %s391 = smul.u32 %s25, 4
      %s392 = ssub.s32 %s391, 1
      %p393 = scmp.gt.s32.totalorder %s392, 0
      %s394 = scalar_select %p393, %s392, 0
      %s395 = smul.u32 2, %s394
      %p396 = scmp.lt.s32.totalorder %s24, 1
      %s397 = scalar_select %p396, %s24, 1
      %p398 = scmp.lt.s32.totalorder %s395, 31
      %s399 = scalar_select %p398, %s395, 31
      %s400 = smul.addr %s397, 32
      %s401 = sadd.s32 %s399, %s400
      %s402 = smul.addr %s401, 4
      %s403 = scalar_lea.vmem %s1, %s402
      %p404 = pneg %p91
      %p405 = pneg %p88
      %s406 = sadd.s32 %s25, 1
      %s407 = smul.u32 %s406, 4
      %p408 = scmp.lt.s32.totalorder %s407, 15
      %s409 = scalar_select %p408, %s407, 15
      %s410 = smul.u32 2, %s409
      %p411 = scmp.lt.s32.totalorder %s24, 1
      %s412 = scalar_select %p411, %s24, 1
      %p413 = scmp.lt.s32.totalorder %s410, 31
      %s414 = scalar_select %p413, %s410, 31
      %s415 = smul.addr %s412, 32
      %s416 = sadd.s32 %s414, %s415
      %s417 = smul.addr %s416, 4
      %s418 = scalar_lea.vmem %s2, %s417
      %p419 = pneg %p127
      %p420 = pneg %p124
      %p421 = pneg %p148
      %p422 = pneg %p145
      %p423 = pneg %p169
      %p424 = pneg %p166
      %p425 = pneg %p190
      %p426 = pneg %p187
      %p427 = pneg %p211
      %p428 = pneg %p208
      %p429 = pneg %p232
      %p430 = pneg %p229
      %p431 = pneg %p253
      %p432 = pneg %p250
      %p433 = pneg %p281
      %p434 = pneg %p278
      %s435 = smul.u32 8, %s25
      %p436 = scmp.lt.s32.totalorder %s24, 1
      %s437 = scalar_select %p436, %s24, 1
      %p438 = scmp.lt.s32.totalorder %s435, 31
      %s439 = scalar_select %p438, %s435, 31
      %s440 = smul.addr %s437, 32
      %s441 = sadd.s32 %s439, %s440
      %s442 = smul.addr %s441, 4
      %s443 = scalar_lea.vmem %s9, %s442
      %s444 = smul.u32 8, %s25
      %p445 = scmp.lt.s32.totalorder %s24, 1
      %s446 = scalar_select %p445, %s24, 1
      %p447 = scmp.lt.s32.totalorder %s444, 31
      %s448 = scalar_select %p447, %s444, 31
      %s449 = smul.addr %s446, 32
      %s450 = sadd.s32 %s448, %s449
      %s451 = smul.addr %s450, 4
      %s452 = scalar_lea.vmem %s0, %s451
      %s453 = smul.u32 8, %s25
      %s454 = smul.u32 %s25, 4
      %s455 = ssub.s32 %s454, 1
      %p456 = scmp.gt.s32.totalorder %s455, 0
      %s457 = scalar_select %p456, %s455, 0
      %s458 = smul.u32 2, %s457
      %p459 = scmp.lt.s32.totalorder %s24, 1
      %s460 = scalar_select %p459, %s24, 1
      %p461 = scmp.lt.s32.totalorder %s458, 31
      %s462 = scalar_select %p461, %s458, 31
      %s463 = smul.addr %s460, 32
      %s464 = sadd.s32 %s462, %s463
      %s465 = smul.addr %s464, 4
      %s466 = scalar_lea.vmem %s1, %s465
      %s467 = smul.u32 %s25, 4
      %s468 = ssub.s32 %s467, 1
      %p469 = scmp.gt.s32.totalorder %s468, 0
      %s470 = scalar_select %p469, %s468, 0
      %s471 = smul.u32 2, %s470
      %s472 = sadd.s32 %s25, 1
      %s473 = smul.u32 %s472, 4
      %p474 = scmp.lt.s32.totalorder %s473, 15
      %s475 = scalar_select %p474, %s473, 15
      %s476 = smul.u32 2, %s475
      %p477 = scmp.lt.s32.totalorder %s24, 1
      %s478 = scalar_select %p477, %s24, 1
      %p479 = scmp.lt.s32.totalorder %s476, 31
      %s480 = scalar_select %p479, %s476, 31
      %s481 = smul.addr %s478, 32
      %s482 = sadd.s32 %s480, %s481
      %s483 = smul.addr %s482, 4
      %s484 = scalar_lea.vmem %s2, %s483
      %s485 = sadd.s32 %s25, 1
      %s486 = smul.u32 %s485, 4
      %p487 = scmp.lt.s32.totalorder %s486, 15
      %s488 = scalar_select %p487, %s486, 15
      %s489 = smul.u32 2, %s488
      %s490 = smul.u32 8, %s25
      %p491 = scmp.lt.s32.totalorder %s24, 1
      %s492 = scalar_select %p491, %s24, 1
      %p493 = scmp.lt.s32.totalorder %s490, 31
      %s494 = scalar_select %p493, %s490, 31
      %s495 = smul.addr %s492, 32
      %s496 = sadd.s32 %s494, %s495
      %s497 = smul.addr %s496, 4
      %s498 = scalar_lea.vmem %s9, %s497
      %s499 = smul.u32 8, %s25
      %v501 = vld [vmem:[%s3] sm:$0xf]
      %v502 = vld [vmem:[%s3 + $0x4] sm:$0xf]
      %v503 = vld [vmem:[%s4] sm:$0x1]
      %v504 = vld [vmem:[%s452] sm:$0xf]
      %v505 = vld [vmem:[%s452 + $0x4] sm:$0xf]
      %v506 = vld [vmem:[%s452 + $0x8] sm:$0xf]
      %v507 = vld [vmem:[%s452 + $0xc] sm:$0xf]
      %v508 = vld [vmem:[%s452 + $0x10] sm:$0xf]
      %v509 = vld [vmem:[%s452 + $0x14] sm:$0xf]
      %v510 = vld [vmem:[%s452 + $0x18] sm:$0xf]
      %v511 = vld [vmem:[%s452 + $0x1c] sm:$0xf]
      %v513 = vlaneseq
      %v514 = vshrl.u32 %v513, 7
      %v515 = vsub.s32 0, %v514
      %v516 = vrot.slane %v503, %v515
      %v526 = vunpack.c.l.b16 %v504
      %v527 = vunpack.c.l.b16 %v505
      %v528 = vunpack.c.l.b16 %v506
      %v529 = vunpack.c.l.b16 %v507
      %v530 = vunpack.c.l.b16 %v508
      %v531 = vunpack.c.l.b16 %v509
      %v532 = vunpack.c.l.b16 %v510
      %v533 = vunpack.c.l.b16 %v511
      %v534 = vpack.c.b16 %v527, %v526
      %v535 = vpack.c.b16 %v529, %v528
      %v536 = vpack.c.b16 %v531, %v530
      %v537 = vpack.c.b16 %v533, %v532
      %v540 = vunpack.c.l.b16 %v501
      %v541 = vunpack.c.l.b16 %v502
      %v542 = vpack.c.b16 %v541, %v540
      %vm544 = vcmask 130048
      %v546 = vsel %vm544, %v534, 0
      %v549 = vsel %vm544, %v535, 0
      %v552 = vsel %vm544, %v536, 0
      %v555 = vsel %vm544, %v537, 0
      %557 = vmatprep.subr.bf16.mxu0 0
      %558 = vmatpush1.bf16.msra.mxu0 0
      %559 = vmatprep.subr.bf16.mxu0 0
      %560 = vmatpush1.bf16.msra.mxu0 0
      %561 = vmatprep.subr.bf16.mxu0 0
      %562 = vmatpush1.bf16.msra.mxu0 0
      %563 = vmatprep.subr.bf16.mxu0 0
      %564 = vmatpush1.bf16.msra.mxu0 0
      %565 = vmatprep.subr.bf16.mxu0 0
      %566 = vmatpush1.bf16.msra.mxu0 0
      %567 = vmatprep.subr.bf16.mxu0 0
      %568 = vmatpush1.bf16.msra.mxu0 0
      %569 = vmatprep.subr.bf16.mxu0 0
      %570 = vmatpush1.bf16.msra.mxu0 0
      %571 = vmatprep.subr.bf16.mxu0 0
      %572 = vmatpush1.bf16.msra.mxu0 %v542
      %573 = vmatprep.subr.bf16.mxu0 0
      %574 = vmatpush2.bf16.msra.mxu0 0
      %575 = vmatprep.subr.bf16.mxu0 0
      %576 = vmatpush2.bf16.msra.mxu0 0
      %577 = vmatprep.subr.bf16.mxu0 0
      %578 = vmatpush2.bf16.msra.mxu0 0
      %579 = vmatprep.subr.bf16.mxu0 0
      %580 = vmatpush2.bf16.msra.mxu0 0
      %581 = vmatprep.subr.bf16.mxu0 0
      %582 = vmatpush2.bf16.msra.mxu0 0
      %583 = vmatprep.subr.bf16.mxu0 0
      %584 = vmatpush2.bf16.msra.mxu0 0
      %585 = vmatprep.subr.bf16.mxu0 0
      %586 = vmatpush2.bf16.msra.mxu0 0
      %587 = vmatprep.subr.bf16.mxu0 0
      %588 = vmatpush2.bf16.msra.mxu0 0
      %589 = vmatprep.mubr.bf16.mxu0 0
      %590 = vmatmul.mubr.bf16.gmra.mxu0 %v546
      %v591 = vpop.f32.mrf.mxu0
      %v592 = vadd.f32 %v516, %v591
      %v593 = vpop.f32.mrf.mxu0
      %v594 = vpop.f32.mrf.mxu0
      %v595 = vadd.f32 %v516, %v594
      %v596 = vpop.f32.mrf.mxu0
      %597 = vmatprep.mubr.bf16.mxu0 0
      %598 = vmatmul.mubr.bf16.gmra.mxu0 %v549
      %v599 = vpop.f32.mrf.mxu0
      %v600 = vadd.f32 %v516, %v599
      %v601 = vpop.f32.mrf.mxu0
      %v602 = vpop.f32.mrf.mxu0
      %v603 = vadd.f32 %v516, %v602
      %v604 = vpop.f32.mrf.mxu0
      %605 = vmatprep.mubr.bf16.mxu0 0
      %606 = vmatmul.mubr.bf16.gmra.mxu0 %v552
      %v607 = vpop.f32.mrf.mxu0
      %v608 = vadd.f32 %v516, %v607
      %v609 = vpop.f32.mrf.mxu0
      %v610 = vpop.f32.mrf.mxu0
      %v611 = vadd.f32 %v516, %v610
      %v612 = vpop.f32.mrf.mxu0
      %613 = vmatprep.mubr.bf16.mxu0 0
      %614 = vmatmul.mubr.bf16.gmra.mxu0 %v555
      %v615 = vpop.f32.mrf.mxu0
      %v616 = vadd.f32 %v516, %v615
      %v617 = vpop.f32.mrf.mxu0
      %v618 = vpop.f32.mrf.mxu0
      %v619 = vadd.f32 %v516, %v618
      %v620 = vpop.f32.mrf.mxu0
      %621 = vdwg.mxu0
      %v622 = vmax.f32 %v592, 0.0
      %v623 = vmax.f32 %v595, 0.0
      %v624 = vmax.f32 %v600, 0.0
      %v625 = vmax.f32 %v603, 0.0
      %v626 = vmax.f32 %v608, 0.0
      %v627 = vmax.f32 %v611, 0.0
      %v628 = vmax.f32 %v616, 0.0
      %v629 = vmax.f32 %v619, 0.0
      %v630 = vld [vmem:[%s466] sm:$0xf]
      %v631 = vld [vmem:[%s466 + $0x4] sm:$0xf]
      %v634 = vunpack.c.l.b16 %v630
      %v635 = vunpack.c.l.b16 %v631
      %v636 = vpack.c.b16 %v635, %v634
      %v638 = vsel %vm544, %v636, 0
      %640 = vmatprep.subr.bf16.mxu0 0
      %641 = vmatpush1.bf16.msra.mxu0 0
      %642 = vmatprep.subr.bf16.mxu0 0
      %643 = vmatpush1.bf16.msra.mxu0 0
      %644 = vmatprep.subr.bf16.mxu0 0
      %645 = vmatpush1.bf16.msra.mxu0 0
      %646 = vmatprep.subr.bf16.mxu0 0
      %647 = vmatpush1.bf16.msra.mxu0 0
      %648 = vmatprep.subr.bf16.mxu0 0
      %649 = vmatpush1.bf16.msra.mxu0 0
      %650 = vmatprep.subr.bf16.mxu0 0
      %651 = vmatpush1.bf16.msra.mxu0 0
      %652 = vmatprep.subr.bf16.mxu0 0
      %653 = vmatpush1.bf16.msra.mxu0 0
      %654 = vmatprep.subr.bf16.mxu0 0
      %655 = vmatpush1.bf16.msra.mxu0 %v542
      %656 = vmatprep.subr.bf16.mxu0 0
      %657 = vmatpush2.bf16.msra.mxu0 0
      %658 = vmatprep.subr.bf16.mxu0 0
      %659 = vmatpush2.bf16.msra.mxu0 0
      %660 = vmatprep.subr.bf16.mxu0 0
      %661 = vmatpush2.bf16.msra.mxu0 0
      %662 = vmatprep.subr.bf16.mxu0 0
      %663 = vmatpush2.bf16.msra.mxu0 0
      %664 = vmatprep.subr.bf16.mxu0 0
      %665 = vmatpush2.bf16.msra.mxu0 0
      %666 = vmatprep.subr.bf16.mxu0 0
      %667 = vmatpush2.bf16.msra.mxu0 0
      %668 = vmatprep.subr.bf16.mxu0 0
      %669 = vmatpush2.bf16.msra.mxu0 0
      %670 = vmatprep.subr.bf16.mxu0 0
      %671 = vmatpush2.bf16.msra.mxu0 0
      %672 = vmatprep.mubr.bf16.mxu0 0
      %673 = vmatmul.mubr.bf16.gmra.mxu0 %v638
      %v674 = vpop.f32.mrf.mxu0
      %v675 = vadd.f32 %v516, %v674
      %v676 = vpop.f32.mrf.mxu0
      %v677 = vpop.f32.mrf.mxu0
      %v678 = vadd.f32 %v516, %v677
      %v679 = vpop.f32.mrf.mxu0
      %680 = vdwg.mxu0
      %v681 = vmax.f32 %v675, 0.0
      %v682 = vmax.f32 %v678, 0.0
      %v683 = vld [vmem:[%s484] sm:$0xf]
      %v684 = vld [vmem:[%s484 + $0x4] sm:$0xf]
      %v687 = vunpack.c.l.b16 %v683
      %v688 = vunpack.c.l.b16 %v684
      %v689 = vpack.c.b16 %v688, %v687
      %v691 = vsel %vm544, %v689, 0
      %693 = vmatprep.subr.bf16.mxu0 0
      %694 = vmatpush1.bf16.msra.mxu0 0
      %695 = vmatprep.subr.bf16.mxu0 0
      %696 = vmatpush1.bf16.msra.mxu0 0
      %697 = vmatprep.subr.bf16.mxu0 0
      %698 = vmatpush1.bf16.msra.mxu0 0
      %699 = vmatprep.subr.bf16.mxu0 0
      %700 = vmatpush1.bf16.msra.mxu0 0
      %701 = vmatprep.subr.bf16.mxu0 0
      %702 = vmatpush1.bf16.msra.mxu0 0
      %703 = vmatprep.subr.bf16.mxu0 0
      %704 = vmatpush1.bf16.msra.mxu0 0
      %705 = vmatprep.subr.bf16.mxu0 0
      %706 = vmatpush1.bf16.msra.mxu0 0
      %707 = vmatprep.subr.bf16.mxu0 0
      %708 = vmatpush1.bf16.msra.mxu0 %v542
      %709 = vmatprep.subr.bf16.mxu0 0
      %710 = vmatpush2.bf16.msra.mxu0 0
      %711 = vmatprep.subr.bf16.mxu0 0
      %712 = vmatpush2.bf16.msra.mxu0 0
      %713 = vmatprep.subr.bf16.mxu0 0
      %714 = vmatpush2.bf16.msra.mxu0 0
      %715 = vmatprep.subr.bf16.mxu0 0
      %716 = vmatpush2.bf16.msra.mxu0 0
      %717 = vmatprep.subr.bf16.mxu0 0
      %718 = vmatpush2.bf16.msra.mxu0 0
      %719 = vmatprep.subr.bf16.mxu0 0
      %720 = vmatpush2.bf16.msra.mxu0 0
      %721 = vmatprep.subr.bf16.mxu0 0
      %722 = vmatpush2.bf16.msra.mxu0 0
      %723 = vmatprep.subr.bf16.mxu0 0
      %724 = vmatpush2.bf16.msra.mxu0 0
      %725 = vmatprep.mubr.bf16.mxu0 0
      %726 = vmatmul.mubr.bf16.gmra.mxu0 %v691
      %v727 = vpop.f32.mrf.mxu0
      %v728 = vadd.f32 %v516, %v727
      %v729 = vpop.f32.mrf.mxu0
      %v730 = vpop.f32.mrf.mxu0
      %v731 = vadd.f32 %v516, %v730
      %v732 = vpop.f32.mrf.mxu0
      %733 = vdwg.mxu0
      %v734 = vmax.f32 %v728, 0.0
      %v735 = vmax.f32 %v731, 0.0
      %p736 = scmp.eq.s32.totalorder %s25, 0
      %s737 = scalar_select %p736, 0.0, 1.0
      %v738 = vstv %s737
      %v739 = vmul.f32 %v681, %v738
      %v740 = vmul.f32 %v682, %v738
      %p741 = scmp.eq.s32.totalorder %s25, 3
      %s742 = scalar_select %p741, 0.0, 1.0
      %v743 = vstv %s742
      %v744 = vmul.f32 %v734, %v743
      %v745 = vmul.f32 %v735, %v743
      %v746 = vlaneseq
      %v747 = vshrl.u32 %v746, 7
      %v748 = vadd.s32 %v747, 8
      %v749 = vadd.s32 %v747, 16
      %v750 = vadd.s32 %v747, 24
      %v751 = vadd.s32 %v747, 32
      %v752 = vadd.s32 %v747, 40
      %v753 = vadd.s32 %v747, 48
      %v754 = vadd.s32 %v747, 56
      %v755 = vadd.s32 %v747, 64
      %v756 = vadd.s32 %v747, 72
      %v757 = vadd.s32 %v747, 80
      %v758 = vadd.s32 %v747, 88
      %vm759 = vcmp.lt.s32.totalorder %v747, 0
      %v760 = vsub.s32 0, %v747
      %v761 = vsel %vm759, %v760, %v747
      %v762 = vshrl.u32 %v761, 4
      %v763 = vand.u32 %v761, 15
      %v764 = vsub.s32 0, %v763
      %v765 = vsel %vm759, %v764, %v763
      %vm766 = vcmp.lt.s32.totalorder %v748, 0
      %v767 = vsub.s32 0, %v748
      %v768 = vsel %vm766, %v767, %v748
      %v769 = vshrl.u32 %v768, 4
      %v770 = vand.u32 %v768, 15
      %v771 = vsub.s32 0, %v770
      %v772 = vsel %vm766, %v771, %v770
      %vm773 = vcmp.lt.s32.totalorder %v749, 0
      %v774 = vsub.s32 0, %v749
      %v775 = vsel %vm773, %v774, %v749
      %v776 = vshrl.u32 %v775, 4
      %v777 = vand.u32 %v775, 15
      %v778 = vsub.s32 0, %v777
      %v779 = vsel %vm773, %v778, %v777
      %vm780 = vcmp.lt.s32.totalorder %v750, 0
      %v781 = vsub.s32 0, %v750
      %v782 = vsel %vm780, %v781, %v750
      %v783 = vshrl.u32 %v782, 4
      %v784 = vand.u32 %v782, 15
      %v785 = vsub.s32 0, %v784
      %v786 = vsel %vm780, %v785, %v784
      %vm787 = vcmp.lt.s32.totalorder %v751, 0
      %v788 = vsub.s32 0, %v751
      %v789 = vsel %vm787, %v788, %v751
      %v790 = vshrl.u32 %v789, 4
      %v791 = vand.u32 %v789, 15
      %v792 = vsub.s32 0, %v791
      %v793 = vsel %vm787, %v792, %v791
      %vm794 = vcmp.lt.s32.totalorder %v752, 0
      %v795 = vsub.s32 0, %v752
      %v796 = vsel %vm794, %v795, %v752
      %v797 = vshrl.u32 %v796, 4
      %v798 = vand.u32 %v796, 15
      %v799 = vsub.s32 0, %v798
      %v800 = vsel %vm794, %v799, %v798
      %vm801 = vcmp.lt.s32.totalorder %v753, 0
      %v802 = vsub.s32 0, %v753
      %v803 = vsel %vm801, %v802, %v753
      %v804 = vshrl.u32 %v803, 4
      %v805 = vand.u32 %v803, 15
      %v806 = vsub.s32 0, %v805
      %v807 = vsel %vm801, %v806, %v805
      %vm808 = vcmp.lt.s32.totalorder %v754, 0
      %v809 = vsub.s32 0, %v754
      %v810 = vsel %vm808, %v809, %v754
      %v811 = vshrl.u32 %v810, 4
      %v812 = vand.u32 %v810, 15
      %v813 = vsub.s32 0, %v812
      %v814 = vsel %vm808, %v813, %v812
      %vm815 = vcmp.lt.s32.totalorder %v755, 0
      %v816 = vsub.s32 0, %v755
      %v817 = vsel %vm815, %v816, %v755
      %v818 = vshrl.u32 %v817, 4
      %v819 = vand.u32 %v817, 15
      %v820 = vsub.s32 0, %v819
      %v821 = vsel %vm815, %v820, %v819
      %vm822 = vcmp.lt.s32.totalorder %v756, 0
      %v823 = vsub.s32 0, %v756
      %v824 = vsel %vm822, %v823, %v756
      %v825 = vshrl.u32 %v824, 4
      %v826 = vand.u32 %v824, 15
      %v827 = vsub.s32 0, %v826
      %v828 = vsel %vm822, %v827, %v826
      %vm829 = vcmp.lt.s32.totalorder %v757, 0
      %v830 = vsub.s32 0, %v757
      %v831 = vsel %vm829, %v830, %v757
      %v832 = vshrl.u32 %v831, 4
      %v833 = vand.u32 %v831, 15
      %v834 = vsub.s32 0, %v833
      %v835 = vsel %vm829, %v834, %v833
      %vm836 = vcmp.lt.s32.totalorder %v758, 0
      %v837 = vsub.s32 0, %v758
      %v838 = vsel %vm836, %v837, %v758
      %v839 = vshrl.u32 %v838, 4
      %v840 = vand.u32 %v838, 15
      %v841 = vsub.s32 0, %v840
      %v842 = vsel %vm836, %v841, %v840
      %vm843 = vcmp.ne.s32.totalorder %v765, 0
      %vm844 = vcmp.ne.s32.totalorder %v772, 0
      %vm845 = vcmp.ne.s32.totalorder %v779, 0
      %vm846 = vcmp.ne.s32.totalorder %v786, 0
      %vm847 = vcmp.ne.s32.totalorder %v793, 0
      %vm848 = vcmp.ne.s32.totalorder %v800, 0
      %vm849 = vcmp.ne.s32.totalorder %v807, 0
      %vm850 = vcmp.ne.s32.totalorder %v814, 0
      %vm851 = vcmp.ne.s32.totalorder %v821, 0
      %vm852 = vcmp.ne.s32.totalorder %v828, 0
      %vm853 = vcmp.ne.s32.totalorder %v835, 0
      %vm854 = vcmp.ne.s32.totalorder %v842, 0
      %vm855 = vcmp.lt.s32.totalorder %v765, 0
      %vm856 = vcmp.lt.s32.totalorder %v772, 0
      %vm857 = vcmp.lt.s32.totalorder %v779, 0
      %vm858 = vcmp.lt.s32.totalorder %v786, 0
      %vm859 = vcmp.lt.s32.totalorder %v793, 0
      %vm860 = vcmp.lt.s32.totalorder %v800, 0
      %vm861 = vcmp.lt.s32.totalorder %v807, 0
      %vm862 = vcmp.lt.s32.totalorder %v814, 0
      %vm863 = vcmp.lt.s32.totalorder %v821, 0
      %vm864 = vcmp.lt.s32.totalorder %v828, 0
      %vm865 = vcmp.lt.s32.totalorder %v835, 0
      %vm866 = vcmp.lt.s32.totalorder %v842, 0
      %vm867 = vmand %vm855, %vm843
      %vm868 = vmand %vm856, %vm844
      %vm869 = vmand %vm857, %vm845
      %vm870 = vmand %vm858, %vm846
      %vm871 = vmand %vm859, %vm847
      %vm872 = vmand %vm860, %vm848
      %vm873 = vmand %vm861, %vm849
      %vm874 = vmand %vm862, %vm850
      %vm875 = vmand %vm863, %vm851
      %vm876 = vmand %vm864, %vm852
      %vm877 = vmand %vm865, %vm853
      %vm878 = vmand %vm866, %vm854
      %v879 = vadd.s32 %v765, 16
      %v880 = vadd.s32 %v772, 16
      %v881 = vadd.s32 %v779, 16
      %v882 = vadd.s32 %v786, 16
      %v883 = vadd.s32 %v793, 16
      %v884 = vadd.s32 %v800, 16
      %v885 = vadd.s32 %v807, 16
      %v886 = vadd.s32 %v814, 16
      %v887 = vadd.s32 %v821, 16
      %v888 = vadd.s32 %v828, 16
      %v889 = vadd.s32 %v835, 16
      %v890 = vadd.s32 %v842, 16
      %v891 = vsel %vm867, %v879, %v765
      %v892 = vsel %vm868, %v880, %v772
      %v893 = vsel %vm869, %v881, %v779
      %v894 = vsel %vm870, %v882, %v786
      %v895 = vsel %vm871, %v883, %v793
      %v896 = vsel %vm872, %v884, %v800
      %v897 = vsel %vm873, %v885, %v807
      %v898 = vsel %vm874, %v886, %v814
      %v899 = vsel %vm875, %v887, %v821
      %v900 = vsel %vm876, %v888, %v828
      %v901 = vsel %vm877, %v889, %v835
      %v902 = vsel %vm878, %v890, %v842
      %vm903 = vcmp.gt.s32.totalorder %v891, 0
      %vm904 = vcmp.gt.s32.totalorder %v892, 0
      %vm905 = vcmp.gt.s32.totalorder %v893, 0
      %vm906 = vcmp.gt.s32.totalorder %v894, 0
      %vm907 = vcmp.gt.s32.totalorder %v895, 0
      %vm908 = vcmp.gt.s32.totalorder %v896, 0
      %vm909 = vcmp.gt.s32.totalorder %v897, 0
      %vm910 = vcmp.gt.s32.totalorder %v898, 0
      %vm911 = vcmp.gt.s32.totalorder %v899, 0
      %vm912 = vcmp.gt.s32.totalorder %v900, 0
      %vm913 = vcmp.gt.s32.totalorder %v901, 0
      %vm914 = vcmp.gt.s32.totalorder %v902, 0
      %vm927 = vcmask 1040384
      %v928 = vrot.slane %v739, 7
      %v929 = vrot.slane %v740, 7
      %v930 = vsel %vm927, %v928, %v929
      %v931 = vrot.slane %v622, 7
      %v932 = vsel %vm927, %v929, %v931
      %v933 = vrot.slane %v623, 7
      %v934 = vsel %vm927, %v931, %v933
      %v935 = vrot.slane %v624, 7
      %v936 = vsel %vm927, %v933, %v935
      %v937 = vrot.slane %v625, 7
      %v938 = vsel %vm927, %v935, %v937
      %v939 = vrot.slane %v626, 7
      %v940 = vsel %vm927, %v937, %v939
      %v941 = vrot.slane %v627, 7
      %v942 = vsel %vm927, %v939, %v941
      %v943 = vrot.slane %v628, 7
      %v944 = vsel %vm927, %v941, %v943
      %v945 = vrot.slane %v629, 7
      %v946 = vsel %vm927, %v943, %v945
      %v947 = vrot.slane %v744, 7
      %v948 = vsel %vm927, %v945, %v947
      %v949 = vrot.slane %v745, 7
      %v950 = vsel %vm927, %v947, %v949
      %v963 = vsel %vm927, 0.0, %v928
      %v964 = vsel %vm903, 1, 0
      %v965 = vsel %vm904, 1, 0
      %v966 = vsel %vm905, 1, 0
      %v967 = vsel %vm906, 1, 0
      %v968 = vsel %vm907, 1, 0
      %v969 = vsel %vm908, 1, 0
      %v970 = vsel %vm909, 1, 0
      %v971 = vsel %vm910, 1, 0
      %v972 = vsel %vm911, 1, 0
      %v973 = vsel %vm912, 1, 0
      %v974 = vsel %vm913, 1, 0
      %v975 = vsel %vm914, 1, 0
      %vm976 = vcmp.eq.s32.totalorder %v964, 1
      %vm977 = vcmp.eq.s32.totalorder %v965, 1
      %vm978 = vcmp.eq.s32.totalorder %v966, 1
      %vm979 = vcmp.eq.s32.totalorder %v967, 1
      %vm980 = vcmp.eq.s32.totalorder %v968, 1
      %vm981 = vcmp.eq.s32.totalorder %v969, 1
      %vm982 = vcmp.eq.s32.totalorder %v970, 1
      %vm983 = vcmp.eq.s32.totalorder %v971, 1
      %vm984 = vcmp.eq.s32.totalorder %v972, 1
      %vm985 = vcmp.eq.s32.totalorder %v973, 1
      %vm986 = vcmp.eq.s32.totalorder %v974, 1
      %vm987 = vcmp.eq.s32.totalorder %v975, 1
      %v988 = vsel %vm976, %v963, 0.0
      %v989 = vsel %vm977, %v930, 0.0
      %v990 = vsel %vm978, %v932, 0.0
      %v991 = vsel %vm979, %v934, 0.0
      %v992 = vsel %vm980, %v936, 0.0
      %v993 = vsel %vm981, %v938, 0.0
      %v994 = vsel %vm982, %v940, 0.0
      %v995 = vsel %vm983, %v942, 0.0
      %v996 = vsel %vm984, %v944, 0.0
      %v997 = vsel %vm985, %v946, 0.0
      %v998 = vsel %vm986, %v948, 0.0
      %v999 = vsel %vm987, %v950, 0.0
      %vm1000 = vcmp.lt.s32.totalorder %v891, 15
      %vm1001 = vcmp.lt.s32.totalorder %v892, 15
      %vm1002 = vcmp.lt.s32.totalorder %v893, 15
      %vm1003 = vcmp.lt.s32.totalorder %v894, 15
      %vm1004 = vcmp.lt.s32.totalorder %v895, 15
      %vm1005 = vcmp.lt.s32.totalorder %v896, 15
      %vm1006 = vcmp.lt.s32.totalorder %v897, 15
      %vm1007 = vcmp.lt.s32.totalorder %v898, 15
      %vm1008 = vcmp.lt.s32.totalorder %v899, 15
      %vm1009 = vcmp.lt.s32.totalorder %v900, 15
      %vm1010 = vcmp.lt.s32.totalorder %v901, 15
      %vm1011 = vcmp.lt.s32.totalorder %v902, 15
      %vm1012 = vcmask 1046528
      %v1013 = vrot.slane %v739, 1
      %v1014 = vrot.slane %v740, 1
      %v1015 = vsel %vm1012, %v1013, %v1014
      %v1016 = vrot.slane %v622, 1
      %v1017 = vsel %vm1012, %v1014, %v1016
      %v1018 = vrot.slane %v623, 1
      %v1019 = vsel %vm1012, %v1016, %v1018
      %v1020 = vrot.slane %v624, 1
      %v1021 = vsel %vm1012, %v1018, %v1020
      %v1022 = vrot.slane %v625, 1
      %v1023 = vsel %vm1012, %v1020, %v1022
      %v1024 = vrot.slane %v626, 1
      %v1025 = vsel %vm1012, %v1022, %v1024
      %v1026 = vrot.slane %v627, 1
      %v1027 = vsel %vm1012, %v1024, %v1026
      %v1028 = vrot.slane %v628, 1
      %v1029 = vsel %vm1012, %v1026, %v1028
      %v1030 = vrot.slane %v629, 1
      %v1031 = vsel %vm1012, %v1028, %v1030
      %v1032 = vrot.slane %v744, 1
      %v1033 = vsel %vm1012, %v1030, %v1032
      %v1034 = vrot.slane %v745, 1
      %v1035 = vsel %vm1012, %v1032, %v1034
      %v1048 = vsel %vm1012, %v1034, 0.0
      %v1049 = vsel %vm1000, 1, 0
      %v1050 = vsel %vm1001, 1, 0
      %v1051 = vsel %vm1002, 1, 0
      %v1052 = vsel %vm1003, 1, 0
      %v1053 = vsel %vm1004, 1, 0
      %v1054 = vsel %vm1005, 1, 0
      %v1055 = vsel %vm1006, 1, 0
      %v1056 = vsel %vm1007, 1, 0
      %v1057 = vsel %vm1008, 1, 0
      %v1058 = vsel %vm1009, 1, 0
      %v1059 = vsel %vm1010, 1, 0
      %v1060 = vsel %vm1011, 1, 0
      %vm1061 = vcmp.eq.s32.totalorder %v1049, 1
      %vm1062 = vcmp.eq.s32.totalorder %v1050, 1
      %vm1063 = vcmp.eq.s32.totalorder %v1051, 1
      %vm1064 = vcmp.eq.s32.totalorder %v1052, 1
      %vm1065 = vcmp.eq.s32.totalorder %v1053, 1
      %vm1066 = vcmp.eq.s32.totalorder %v1054, 1
      %vm1067 = vcmp.eq.s32.totalorder %v1055, 1
      %vm1068 = vcmp.eq.s32.totalorder %v1056, 1
      %vm1069 = vcmp.eq.s32.totalorder %v1057, 1
      %vm1070 = vcmp.eq.s32.totalorder %v1058, 1
      %vm1071 = vcmp.eq.s32.totalorder %v1059, 1
      %vm1072 = vcmp.eq.s32.totalorder %v1060, 1
      %v1073 = vsel %vm1061, %v1015, 0.0
      %v1074 = vsel %vm1062, %v1017, 0.0
      %v1075 = vsel %vm1063, %v1019, 0.0
      %v1076 = vsel %vm1064, %v1021, 0.0
      %v1077 = vsel %vm1065, %v1023, 0.0
      %v1078 = vsel %vm1066, %v1025, 0.0
      %v1079 = vsel %vm1067, %v1027, 0.0
      %v1080 = vsel %vm1068, %v1029, 0.0
      %v1081 = vsel %vm1069, %v1031, 0.0
      %v1082 = vsel %vm1070, %v1033, 0.0
      %v1083 = vsel %vm1071, %v1035, 0.0
      %v1084 = vsel %vm1072, %v1048, 0.0
      %v1085 = vpack.c.bf16 %v989, %v988
      %v1086 = vpack.c.bf16 %v991, %v990
      %v1087 = vpack.c.bf16 %v993, %v992
      %v1088 = vpack.c.bf16 %v995, %v994
      %v1093 = vunpack.c.l.b16 %v1085
      %v1094 = vunpack.c.h.b16 %v1085
      %v1095 = vunpack.c.l.b16 %v1086
      %v1096 = vunpack.c.h.b16 %v1086
      %v1097 = vunpack.c.l.b16 %v1087
      %v1098 = vunpack.c.h.b16 %v1087
      %v1099 = vunpack.c.l.b16 %v1088
      %v1100 = vunpack.c.h.b16 %v1088
      %v1101 = vpack.c.b16 %v1093, %v1093
      %v1102 = vpack.c.b16 %v1094, %v1094
      %v1103 = vpack.c.b16 %v1095, %v1095
      %v1104 = vpack.c.b16 %v1096, %v1096
      %v1105 = vpack.c.b16 %v1097, %v1097
      %v1106 = vpack.c.b16 %v1098, %v1098
      %v1107 = vpack.c.b16 %v1099, %v1099
      %v1108 = vpack.c.b16 %v1100, %v1100
      %1117 = vst [vmem:[#allocation2] sm:$0xf] %v1101
      %1118 = vst [vmem:[#allocation2 + $0x24] sm:$0xf] %v1102
      %1119 = vst [vmem:[#allocation2 + $0x48] sm:$0xf] %v1103
      %1120 = vst [vmem:[#allocation2 + $0x6c] sm:$0xf] %v1104
      %1121 = vst [vmem:[#allocation2 + $0x90] sm:$0xf] %v1105
      %1122 = vst [vmem:[#allocation2 + $0xb4] sm:$0xf] %v1106
      %1123 = vst [vmem:[#allocation2 + $0xd8] sm:$0xf] %v1107
      %1124 = vst [vmem:[#allocation2 + $0xfc] sm:$0xf] %v1108
      %v1125 = vpack.c.bf16 %v740, %v739
      %v1126 = vpack.c.bf16 %v623, %v622
      %v1127 = vpack.c.bf16 %v625, %v624
      %v1128 = vpack.c.bf16 %v627, %v626
      %v1133 = vunpack.c.l.b16 %v1125
      %v1134 = vunpack.c.h.b16 %v1125
      %v1135 = vunpack.c.l.b16 %v1126
      %v1136 = vunpack.c.h.b16 %v1126
      %v1137 = vunpack.c.l.b16 %v1127
      %v1138 = vunpack.c.h.b16 %v1127
      %v1139 = vunpack.c.l.b16 %v1128
      %v1140 = vunpack.c.h.b16 %v1128
      %v1141 = vpack.c.b16 %v1133, %v1133
      %v1142 = vpack.c.b16 %v1134, %v1134
      %v1143 = vpack.c.b16 %v1135, %v1135
      %v1144 = vpack.c.b16 %v1136, %v1136
      %v1145 = vpack.c.b16 %v1137, %v1137
      %v1146 = vpack.c.b16 %v1138, %v1138
      %v1147 = vpack.c.b16 %v1139, %v1139
      %v1148 = vpack.c.b16 %v1140, %v1140
      %1157 = vst [vmem:[#allocation2 + $0x4] sm:$0xf] %v1141
      %1158 = vst [vmem:[#allocation2 + $0x28] sm:$0xf] %v1142
      %1159 = vst [vmem:[#allocation2 + $0x4c] sm:$0xf] %v1143
      %1160 = vst [vmem:[#allocation2 + $0x70] sm:$0xf] %v1144
      %1161 = vst [vmem:[#allocation2 + $0x94] sm:$0xf] %v1145
      %1162 = vst [vmem:[#allocation2 + $0xb8] sm:$0xf] %v1146
      %1163 = vst [vmem:[#allocation2 + $0xdc] sm:$0xf] %v1147
      %1164 = vst [vmem:[#allocation2 + $0x100] sm:$0xf] %v1148
      %v1165 = vpack.c.bf16 %v1074, %v1073
      %v1166 = vpack.c.bf16 %v1076, %v1075
      %v1167 = vpack.c.bf16 %v1078, %v1077
      %v1168 = vpack.c.bf16 %v1080, %v1079
      %v1173 = vunpack.c.l.b16 %v1165
      %v1174 = vunpack.c.h.b16 %v1165
      %v1175 = vunpack.c.l.b16 %v1166
      %v1176 = vunpack.c.h.b16 %v1166
      %v1177 = vunpack.c.l.b16 %v1167
      %v1178 = vunpack.c.h.b16 %v1167
      %v1179 = vunpack.c.l.b16 %v1168
      %v1180 = vunpack.c.h.b16 %v1168
      %v1181 = vpack.c.b16 %v1173, %v1173
      %v1182 = vpack.c.b16 %v1174, %v1174
      %v1183 = vpack.c.b16 %v1175, %v1175
      %v1184 = vpack.c.b16 %v1176, %v1176
      %v1185 = vpack.c.b16 %v1177, %v1177
      %v1186 = vpack.c.b16 %v1178, %v1178
      %v1187 = vpack.c.b16 %v1179, %v1179
      %v1188 = vpack.c.b16 %v1180, %v1180
      %1197 = vst [vmem:[#allocation2 + $0x8] sm:$0xf] %v1181
      %1198 = vst [vmem:[#allocation2 + $0x2c] sm:$0xf] %v1182
      %1199 = vst [vmem:[#allocation2 + $0x50] sm:$0xf] %v1183
      %1200 = vst [vmem:[#allocation2 + $0x74] sm:$0xf] %v1184
      %1201 = vst [vmem:[#allocation2 + $0x98] sm:$0xf] %v1185
      %1202 = vst [vmem:[#allocation2 + $0xbc] sm:$0xf] %v1186
      %1203 = vst [vmem:[#allocation2 + $0xe0] sm:$0xf] %v1187
      %1204 = vst [vmem:[#allocation2 + $0x104] sm:$0xf] %v1188
      %v1205 = vpack.c.bf16 %v997, %v996
      %v1207 = vunpack.c.l.b16 %v1205
      %v1208 = vunpack.c.h.b16 %v1205
      %v1209 = vpack.c.b16 %v1207, %v1207
      %v1210 = vpack.c.b16 %v1208, %v1208
      %1213 = vst [vmem:[#allocation2 + $0xc] sm:$0xf] %v1103
      %1214 = vst [vmem:[#allocation2 + $0x30] sm:$0xf] %v1104
      %1215 = vst [vmem:[#allocation2 + $0x54] sm:$0xf] %v1105
      %1216 = vst [vmem:[#allocation2 + $0x78] sm:$0xf] %v1106
      %1217 = vst [vmem:[#allocation2 + $0x9c] sm:$0xf] %v1107
      %1218 = vst [vmem:[#allocation2 + $0xc0] sm:$0xf] %v1108
      %1219 = vst [vmem:[#allocation2 + $0xe4] sm:$0xf] %v1209
      %1220 = vst [vmem:[#allocation2 + $0x108] sm:$0xf] %v1210
      %v1221 = vpack.c.bf16 %v629, %v628
      %v1223 = vunpack.c.l.b16 %v1221
      %v1224 = vunpack.c.h.b16 %v1221
      %v1225 = vpack.c.b16 %v1223, %v1223
      %v1226 = vpack.c.b16 %v1224, %v1224
      %1229 = vst [vmem:[#allocation2 + $0x10] sm:$0xf] %v1143
      %1230 = vst [vmem:[#allocation2 + $0x34] sm:$0xf] %v1144
      %1231 = vst [vmem:[#allocation2 + $0x58] sm:$0xf] %v1145
      %1232 = vst [vmem:[#allocation2 + $0x7c] sm:$0xf] %v1146
      %1233 = vst [vmem:[#allocation2 + $0xa0] sm:$0xf] %v1147
      %1234 = vst [vmem:[#allocation2 + $0xc4] sm:$0xf] %v1148
      %1235 = vst [vmem:[#allocation2 + $0xe8] sm:$0xf] %v1225
      %1236 = vst [vmem:[#allocation2 + $0x10c] sm:$0xf] %v1226
      %v1237 = vpack.c.bf16 %v1082, %v1081
      %v1239 = vunpack.c.l.b16 %v1237
      %v1240 = vunpack.c.h.b16 %v1237
      %v1241 = vpack.c.b16 %v1239, %v1239
      %v1242 = vpack.c.b16 %v1240, %v1240
      %1245 = vst [vmem:[#allocation2 + $0x14] sm:$0xf] %v1183
      %1246 = vst [vmem:[#allocation2 + $0x38] sm:$0xf] %v1184
      %1247 = vst [vmem:[#allocation2 + $0x5c] sm:$0xf] %v1185
      %1248 = vst [vmem:[#allocation2 + $0x80] sm:$0xf] %v1186
      %1249 = vst [vmem:[#allocation2 + $0xa4] sm:$0xf] %v1187
      %1250 = vst [vmem:[#allocation2 + $0xc8] sm:$0xf] %v1188
      %1251 = vst [vmem:[#allocation2 + $0xec] sm:$0xf] %v1241
      %1252 = vst [vmem:[#allocation2 + $0x110] sm:$0xf] %v1242
      %v1253 = vpack.c.bf16 %v999, %v998
      %v1255 = vunpack.c.l.b16 %v1253
      %v1256 = vunpack.c.h.b16 %v1253
      %v1257 = vpack.c.b16 %v1255, %v1255
      %v1258 = vpack.c.b16 %v1256, %v1256
      %1261 = vst [vmem:[#allocation2 + $0x18] sm:$0xf] %v1105
      %1262 = vst [vmem:[#allocation2 + $0x3c] sm:$0xf] %v1106
      %1263 = vst [vmem:[#allocation2 + $0x60] sm:$0xf] %v1107
      %1264 = vst [vmem:[#allocation2 + $0x84] sm:$0xf] %v1108
      %1265 = vst [vmem:[#allocation2 + $0xa8] sm:$0xf] %v1209
      %1266 = vst [vmem:[#allocation2 + $0xcc] sm:$0xf] %v1210
      %1267 = vst [vmem:[#allocation2 + $0xf0] sm:$0xf] %v1257
      %1268 = vst [vmem:[#allocation2 + $0x114] sm:$0xf] %v1258
      %v1269 = vpack.c.bf16 %v745, %v744
      %v1271 = vunpack.c.l.b16 %v1269
      %v1272 = vunpack.c.h.b16 %v1269
      %v1273 = vpack.c.b16 %v1271, %v1271
      %v1274 = vpack.c.b16 %v1272, %v1272
      %1277 = vst [vmem:[#allocation2 + $0x1c] sm:$0xf] %v1145
      %1278 = vst [vmem:[#allocation2 + $0x40] sm:$0xf] %v1146
      %1279 = vst [vmem:[#allocation2 + $0x64] sm:$0xf] %v1147
      %1280 = vst [vmem:[#allocation2 + $0x88] sm:$0xf] %v1148
      %1281 = vst [vmem:[#allocation2 + $0xac] sm:$0xf] %v1225
      %1282 = vst [vmem:[#allocation2 + $0xd0] sm:$0xf] %v1226
      %1283 = vst [vmem:[#allocation2 + $0xf4] sm:$0xf] %v1273
      %1284 = vst [vmem:[#allocation2 + $0x118] sm:$0xf] %v1274
      %v1285 = vpack.c.bf16 %v1084, %v1083
      %v1287 = vunpack.c.l.b16 %v1285
      %v1288 = vunpack.c.h.b16 %v1285
      %v1289 = vpack.c.b16 %v1287, %v1287
      %v1290 = vpack.c.b16 %v1288, %v1288
      %1293 = vst [vmem:[#allocation2 + $0x20] sm:$0xf] %v1185
      %1294 = vst [vmem:[#allocation2 + $0x44] sm:$0xf] %v1186
      %1295 = vst [vmem:[#allocation2 + $0x68] sm:$0xf] %v1187
      %1296 = vst [vmem:[#allocation2 + $0x8c] sm:$0xf] %v1188
      %1297 = vst [vmem:[#allocation2 + $0xb0] sm:$0xf] %v1241
      %1298 = vst [vmem:[#allocation2 + $0xd4] sm:$0xf] %v1242
      %1299 = vst [vmem:[#allocation2 + $0xf8] sm:$0xf] %v1289
      %1300 = vst [vmem:[#allocation2 + $0x11c] sm:$0xf] %v1290
      %v1301 = vld [vmem:[#allocation2] sm:$0xff]
      %v1302 = vld [vmem:[#allocation2 + $0x8] sm:$0xff]
      %v1303 = vld [vmem:[#allocation2 + $0x10] sm:$0xff]
      %v1304 = vld [vmem:[#allocation2 + $0x18] sm:$0xff]
      %v1305 = vld [vmem:[#allocation2 + $0x20] sm:$0xf]
      %v1306 = vld [vmem:[#allocation2 + $0x24] sm:$0xff]
      %v1307 = vld [vmem:[#allocation2 + $0x2c] sm:$0xff]
      %v1308 = vld [vmem:[#allocation2 + $0x34] sm:$0xff]
      %v1309 = vld [vmem:[#allocation2 + $0x3c] sm:$0xff]
      %v1310 = vld [vmem:[#allocation2 + $0x44] sm:$0xf]
      %v1311 = vld [vmem:[#allocation2 + $0x48] sm:$0xff]
      %v1312 = vld [vmem:[#allocation2 + $0x50] sm:$0xff]
      %v1313 = vld [vmem:[#allocation2 + $0x58] sm:$0xff]
      %v1314 = vld [vmem:[#allocation2 + $0x60] sm:$0xff]
      %v1315 = vld [vmem:[#allocation2 + $0x68] sm:$0xf]
      %v1316 = vld [vmem:[#allocation2 + $0x6c] sm:$0xff]
      %v1317 = vld [vmem:[#allocation2 + $0x74] sm:$0xff]
      %v1318 = vld [vmem:[#allocation2 + $0x7c] sm:$0xff]
      %v1319 = vld [vmem:[#allocation2 + $0x84] sm:$0xff]
      %v1320 = vld [vmem:[#allocation2 + $0x8c] sm:$0xf]
      %v1321 = vld [vmem:[#allocation2 + $0x90] sm:$0xff]
      %v1322 = vld [vmem:[#allocation2 + $0x98] sm:$0xff]
      %v1323 = vld [vmem:[#allocation2 + $0xa0] sm:$0xff]
      %v1324 = vld [vmem:[#allocation2 + $0xa8] sm:$0xff]
      %v1325 = vld [vmem:[#allocation2 + $0xb0] sm:$0xf]
      %v1326 = vld [vmem:[#allocation2 + $0xb4] sm:$0xff]
      %v1327 = vld [vmem:[#allocation2 + $0xbc] sm:$0xff]
      %v1328 = vld [vmem:[#allocation2 + $0xc4] sm:$0xff]
      %v1329 = vld [vmem:[#allocation2 + $0xcc] sm:$0xff]
      %v1330 = vld [vmem:[#allocation2 + $0xd4] sm:$0xf]
      %v1331 = vld [vmem:[#allocation2 + $0xd8] sm:$0xff]
      %v1332 = vld [vmem:[#allocation2 + $0xe0] sm:$0xff]
      %v1333 = vld [vmem:[#allocation2 + $0xe8] sm:$0xff]
      %v1334 = vld [vmem:[#allocation2 + $0xf0] sm:$0xff]
      %v1335 = vld [vmem:[#allocation2 + $0xf8] sm:$0xf]
      %v1336 = vld [vmem:[#allocation2 + $0xfc] sm:$0xff]
      %v1337 = vld [vmem:[#allocation2 + $0x104] sm:$0xff]
      %v1338 = vld [vmem:[#allocation2 + $0x10c] sm:$0xff]
      %v1339 = vld [vmem:[#allocation2 + $0x114] sm:$0xff]
      %v1340 = vld [vmem:[#allocation2 + $0x11c] sm:$0xf]
      %v1341 = vld [vmem:[%s5] sm:$0xf]
      %v1342 = vld [vmem:[%s5 + $0x4] sm:$0xf]
      %v1343 = vld [vmem:[%s5 + $0x8] sm:$0xf]
      %v1344 = vld [vmem:[%s5 + $0xc] sm:$0xf]
      %v1345 = vld [vmem:[%s5 + $0x10] sm:$0xf]
      %v1346 = vld [vmem:[%s5 + $0x14] sm:$0xf]
      %v1347 = vld [vmem:[%s5 + $0x18] sm:$0xf]
      %v1348 = vld [vmem:[%s5 + $0x1c] sm:$0xf]
      %v1349 = vld [vmem:[%s5 + $0x20] sm:$0xf]
      %v1350 = vld [vmem:[%s5 + $0x24] sm:$0xf]
      %v1351 = vld [vmem:[%s5 + $0x28] sm:$0xf]
      %v1352 = vld [vmem:[%s5 + $0x2c] sm:$0xf]
      %v1353 = vld [vmem:[%s5 + $0x30] sm:$0xf]
      %v1354 = vld [vmem:[%s5 + $0x34] sm:$0xf]
      %v1355 = vld [vmem:[%s5 + $0x38] sm:$0xf]
      %v1356 = vld [vmem:[%s5 + $0x3c] sm:$0xf]
      %v1357 = vld [vmem:[%s5 + $0x40] sm:$0xf]
      %v1358 = vld [vmem:[%s5 + $0x44] sm:$0xf]
      %v1359 = vld [vmem:[%s5 + $0x48] sm:$0xf]
      %v1360 = vld [vmem:[%s5 + $0x4c] sm:$0xf]
      %v1361 = vld [vmem:[%s5 + $0x50] sm:$0xf]
      %v1362 = vld [vmem:[%s5 + $0x54] sm:$0xf]
      %v1363 = vld [vmem:[%s5 + $0x58] sm:$0xf]
      %v1364 = vld [vmem:[%s5 + $0x5c] sm:$0xf]
      %v1365 = vld [vmem:[%s5 + $0x60] sm:$0xf]
      %v1366 = vld [vmem:[%s5 + $0x64] sm:$0xf]
      %v1367 = vld [vmem:[%s5 + $0x68] sm:$0xf]
      %v1368 = vld [vmem:[%s5 + $0x6c] sm:$0xf]
      %v1369 = vld [vmem:[%s5 + $0x70] sm:$0xf]
      %v1370 = vld [vmem:[%s5 + $0x74] sm:$0xf]
      %v1371 = vld [vmem:[%s5 + $0x78] sm:$0xf]
      %v1372 = vld [vmem:[%s5 + $0x7c] sm:$0xf]
      %v1373 = vld [vmem:[%s5 + $0x80] sm:$0xf]
      %v1374 = vld [vmem:[%s5 + $0x84] sm:$0xf]
      %v1375 = vld [vmem:[%s5 + $0x88] sm:$0xf]
      %v1376 = vld [vmem:[%s5 + $0x8c] sm:$0xf]
      %v1377 = vld [vmem:[%s5 + $0x90] sm:$0xf]
      %v1378 = vld [vmem:[%s5 + $0x94] sm:$0xf]
      %v1379 = vld [vmem:[%s5 + $0x98] sm:$0xf]
      %v1380 = vld [vmem:[%s5 + $0x9c] sm:$0xf]
      %v1381 = vld [vmem:[%s5 + $0xa0] sm:$0xf]
      %v1382 = vld [vmem:[%s5 + $0xa4] sm:$0xf]
      %v1383 = vld [vmem:[%s5 + $0xa8] sm:$0xf]
      %v1384 = vld [vmem:[%s5 + $0xac] sm:$0xf]
      %v1385 = vld [vmem:[%s5 + $0xb0] sm:$0xf]
      %v1386 = vld [vmem:[%s5 + $0xb4] sm:$0xf]
      %v1387 = vld [vmem:[%s5 + $0xb8] sm:$0xf]
      %v1388 = vld [vmem:[%s5 + $0xbc] sm:$0xf]
      %v1389 = vld [vmem:[%s5 + $0xc0] sm:$0xf]
      %v1390 = vld [vmem:[%s5 + $0xc4] sm:$0xf]
      %v1391 = vld [vmem:[%s5 + $0xc8] sm:$0xf]
      %v1392 = vld [vmem:[%s5 + $0xcc] sm:$0xf]
      %v1393 = vld [vmem:[%s5 + $0xd0] sm:$0xf]
      %v1394 = vld [vmem:[%s5 + $0xd4] sm:$0xf]
      %v1395 = vld [vmem:[%s5 + $0xd8] sm:$0xf]
      %v1396 = vld [vmem:[%s5 + $0xdc] sm:$0xf]
      %v1397 = vld [vmem:[%s5 + $0xe0] sm:$0xf]
      %v1398 = vld [vmem:[%s5 + $0xe4] sm:$0xf]
      %v1399 = vld [vmem:[%s5 + $0xe8] sm:$0xf]
      %v1400 = vld [vmem:[%s5 + $0xec] sm:$0xf]
      %v1401 = vld [vmem:[%s5 + $0xf0] sm:$0xf]
      %v1402 = vld [vmem:[%s5 + $0xf4] sm:$0xf]
      %v1403 = vld [vmem:[%s5 + $0xf8] sm:$0xf]
      %v1404 = vld [vmem:[%s5 + $0xfc] sm:$0xf]
      %v1405 = vld [vmem:[%s5 + $0x100] sm:$0xf]
      %v1406 = vld [vmem:[%s5 + $0x104] sm:$0xf]
      %v1407 = vld [vmem:[%s5 + $0x108] sm:$0xf]
      %v1408 = vld [vmem:[%s5 + $0x10c] sm:$0xf]
      %v1409 = vld [vmem:[%s5 + $0x110] sm:$0xf]
      %v1410 = vld [vmem:[%s5 + $0x114] sm:$0xf]
      %v1411 = vld [vmem:[%s5 + $0x118] sm:$0xf]
      %v1412 = vld [vmem:[%s5 + $0x11c] sm:$0xf]
      %v1413 = vld [vmem:[%s5 + $0x120] sm:$0xf]
      %v1414 = vld [vmem:[%s5 + $0x124] sm:$0xf]
      %v1415 = vld [vmem:[%s5 + $0x128] sm:$0xf]
      %v1416 = vld [vmem:[%s5 + $0x12c] sm:$0xf]
      %v1417 = vld [vmem:[%s5 + $0x130] sm:$0xf]
      %v1418 = vld [vmem:[%s5 + $0x134] sm:$0xf]
      %v1419 = vld [vmem:[%s5 + $0x138] sm:$0xf]
      %v1420 = vld [vmem:[%s5 + $0x13c] sm:$0xf]
      %v1421 = vld [vmem:[%s5 + $0x140] sm:$0xf]
      %v1422 = vld [vmem:[%s5 + $0x144] sm:$0xf]
      %v1423 = vld [vmem:[%s5 + $0x148] sm:$0xf]
      %v1424 = vld [vmem:[%s5 + $0x14c] sm:$0xf]
      %v1425 = vld [vmem:[%s5 + $0x150] sm:$0xf]
      %v1426 = vld [vmem:[%s5 + $0x154] sm:$0xf]
      %v1427 = vld [vmem:[%s5 + $0x158] sm:$0xf]
      %v1428 = vld [vmem:[%s5 + $0x15c] sm:$0xf]
      %v1429 = vld [vmem:[%s5 + $0x160] sm:$0xf]
      %v1430 = vld [vmem:[%s5 + $0x164] sm:$0xf]
      %v1431 = vld [vmem:[%s5 + $0x168] sm:$0xf]
      %v1432 = vld [vmem:[%s5 + $0x16c] sm:$0xf]
      %v1433 = vld [vmem:[%s5 + $0x170] sm:$0xf]
      %v1434 = vld [vmem:[%s5 + $0x174] sm:$0xf]
      %v1435 = vld [vmem:[%s5 + $0x178] sm:$0xf]
      %v1436 = vld [vmem:[%s5 + $0x17c] sm:$0xf]
      %v1437 = vld [vmem:[%s5 + $0x180] sm:$0xf]
      %v1438 = vld [vmem:[%s5 + $0x184] sm:$0xf]
      %v1439 = vld [vmem:[%s5 + $0x188] sm:$0xf]
      %v1440 = vld [vmem:[%s5 + $0x18c] sm:$0xf]
      %v1441 = vld [vmem:[%s5 + $0x190] sm:$0xf]
      %v1442 = vld [vmem:[%s5 + $0x194] sm:$0xf]
      %v1443 = vld [vmem:[%s5 + $0x198] sm:$0xf]
      %v1444 = vld [vmem:[%s5 + $0x19c] sm:$0xf]
      %v1445 = vld [vmem:[%s5 + $0x1a0] sm:$0xf]
      %v1446 = vld [vmem:[%s5 + $0x1a4] sm:$0xf]
      %v1447 = vld [vmem:[%s5 + $0x1a8] sm:$0xf]
      %v1448 = vld [vmem:[%s5 + $0x1ac] sm:$0xf]
      %v1449 = vld [vmem:[%s5 + $0x1b0] sm:$0xf]
      %v1450 = vld [vmem:[%s5 + $0x1b4] sm:$0xf]
      %v1451 = vld [vmem:[%s5 + $0x1b8] sm:$0xf]
      %v1452 = vld [vmem:[%s5 + $0x1bc] sm:$0xf]
      %v1453 = vld [vmem:[%s5 + $0x1c0] sm:$0xf]
      %v1454 = vld [vmem:[%s5 + $0x1c4] sm:$0xf]
      %v1455 = vld [vmem:[%s5 + $0x1c8] sm:$0xf]
      %v1456 = vld [vmem:[%s5 + $0x1cc] sm:$0xf]
      %v1457 = vld [vmem:[%s5 + $0x1d0] sm:$0xf]
      %v1458 = vld [vmem:[%s5 + $0x1d4] sm:$0xf]
      %v1459 = vld [vmem:[%s5 + $0x1d8] sm:$0xf]
      %v1460 = vld [vmem:[%s5 + $0x1dc] sm:$0xf]
      %v1461 = vld [vmem:[%s5 + $0x1e0] sm:$0xf]
      %v1462 = vld [vmem:[%s5 + $0x1e4] sm:$0xf]
      %v1463 = vld [vmem:[%s5 + $0x1e8] sm:$0xf]
      %v1464 = vld [vmem:[%s5 + $0x1ec] sm:$0xf]
      %v1465 = vld [vmem:[%s5 + $0x1f0] sm:$0xf]
      %v1466 = vld [vmem:[%s5 + $0x1f4] sm:$0xf]
      %v1467 = vld [vmem:[%s5 + $0x1f8] sm:$0xf]
      %v1468 = vld [vmem:[%s5 + $0x1fc] sm:$0xf]
      %v1469 = vld [vmem:[%s5 + $0x200] sm:$0xf]
      %v1470 = vld [vmem:[%s5 + $0x204] sm:$0xf]
      %v1471 = vld [vmem:[%s5 + $0x208] sm:$0xf]
      %v1472 = vld [vmem:[%s5 + $0x20c] sm:$0xf]
      %v1473 = vld [vmem:[%s5 + $0x210] sm:$0xf]
      %v1474 = vld [vmem:[%s5 + $0x214] sm:$0xf]
      %v1475 = vld [vmem:[%s5 + $0x218] sm:$0xf]
      %v1476 = vld [vmem:[%s5 + $0x21c] sm:$0xf]
      %v1477 = vld [vmem:[%s5 + $0x220] sm:$0xf]
      %v1478 = vld [vmem:[%s5 + $0x224] sm:$0xf]
      %v1479 = vld [vmem:[%s5 + $0x228] sm:$0xf]
      %v1480 = vld [vmem:[%s5 + $0x22c] sm:$0xf]
      %v1481 = vld [vmem:[%s5 + $0x230] sm:$0xf]
      %v1482 = vld [vmem:[%s5 + $0x234] sm:$0xf]
      %v1483 = vld [vmem:[%s5 + $0x238] sm:$0xf]
      %v1484 = vld [vmem:[%s5 + $0x23c] sm:$0xf]
      %v1485 = vld [vmem:[%s6] sm:$0x1]
      %v1487 = vlaneseq
      %v1488 = vshrl.u32 %v1487, 7
      %v1489 = vsub.s32 0, %v1488
      %v1490 = vrot.slane %v1485, %v1489
      %v1532 = vunpack.c.l.b16 %v1301
      %v1533 = vunpack.c.h.b16 %v1301
      %v1534 = vunpack.c.l.b16 %v1302
      %v1535 = vunpack.c.h.b16 %v1302
      %v1536 = vunpack.c.l.b16 %v1303
      %v1537 = vunpack.c.h.b16 %v1303
      %v1538 = vunpack.c.l.b16 %v1304
      %v1539 = vunpack.c.h.b16 %v1304
      %v1540 = vunpack.c.l.b16 %v1305
      %v1541 = vunpack.c.l.b16 %v1306
      %v1542 = vunpack.c.h.b16 %v1306
      %v1543 = vunpack.c.l.b16 %v1307
      %v1544 = vunpack.c.h.b16 %v1307
      %v1545 = vunpack.c.l.b16 %v1308
      %v1546 = vunpack.c.h.b16 %v1308
      %v1547 = vunpack.c.l.b16 %v1309
      %v1548 = vunpack.c.h.b16 %v1309
      %v1549 = vunpack.c.l.b16 %v1310
      %v1550 = vunpack.c.l.b16 %v1311
      %v1551 = vunpack.c.h.b16 %v1311
      %v1552 = vunpack.c.l.b16 %v1312
      %v1553 = vunpack.c.h.b16 %v1312
      %v1554 = vunpack.c.l.b16 %v1313
      %v1555 = vunpack.c.h.b16 %v1313
      %v1556 = vunpack.c.l.b16 %v1314
      %v1557 = vunpack.c.h.b16 %v1314
      %v1558 = vunpack.c.l.b16 %v1315
      %v1559 = vunpack.c.l.b16 %v1316
      %v1560 = vunpack.c.h.b16 %v1316
      %v1561 = vunpack.c.l.b16 %v1317
      %v1562 = vunpack.c.h.b16 %v1317
      %v1563 = vunpack.c.l.b16 %v1318
      %v1564 = vunpack.c.h.b16 %v1318
      %v1565 = vunpack.c.l.b16 %v1319
      %v1566 = vunpack.c.h.b16 %v1319
      %v1567 = vunpack.c.l.b16 %v1320
      %v1568 = vunpack.c.l.b16 %v1321
      %v1569 = vunpack.c.h.b16 %v1321
      %v1570 = vunpack.c.l.b16 %v1322
      %v1571 = vunpack.c.h.b16 %v1322
      %v1572 = vunpack.c.l.b16 %v1323
      %v1573 = vunpack.c.h.b16 %v1323
      %v1574 = vunpack.c.l.b16 %v1324
      %v1575 = vunpack.c.h.b16 %v1324
      %v1576 = vunpack.c.l.b16 %v1325
      %v1577 = vunpack.c.l.b16 %v1326
      %v1578 = vunpack.c.h.b16 %v1326
      %v1579 = vunpack.c.l.b16 %v1327
      %v1580 = vunpack.c.h.b16 %v1327
      %v1581 = vunpack.c.l.b16 %v1328
      %v1582 = vunpack.c.h.b16 %v1328
      %v1583 = vunpack.c.l.b16 %v1329
      %v1584 = vunpack.c.h.b16 %v1329
      %v1585 = vunpack.c.l.b16 %v1330
      %v1586 = vunpack.c.l.b16 %v1331
      %v1587 = vunpack.c.h.b16 %v1331
      %v1588 = vunpack.c.l.b16 %v1332
      %v1589 = vunpack.c.h.b16 %v1332
      %v1590 = vunpack.c.l.b16 %v1333
      %v1591 = vunpack.c.h.b16 %v1333
      %v1592 = vunpack.c.l.b16 %v1334
      %v1593 = vunpack.c.h.b16 %v1334
      %v1594 = vunpack.c.l.b16 %v1335
      %v1595 = vunpack.c.l.b16 %v1336
      %v1596 = vunpack.c.h.b16 %v1336
      %v1597 = vunpack.c.l.b16 %v1337
      %v1598 = vunpack.c.h.b16 %v1337
      %v1599 = vunpack.c.l.b16 %v1338
      %v1600 = vunpack.c.h.b16 %v1338
      %v1601 = vunpack.c.l.b16 %v1339
      %v1602 = vunpack.c.h.b16 %v1339
      %v1603 = vunpack.c.l.b16 %v1340
      %v1604 = vpack.c.b16 %v1541, %v1532
      %v1605 = vpack.c.b16 %v1542, %v1533
      %v1606 = vpack.c.b16 %v1543, %v1534
      %v1607 = vpack.c.b16 %v1544, %v1535
      %v1608 = vpack.c.b16 %v1545, %v1536
      %v1609 = vpack.c.b16 %v1546, %v1537
      %v1610 = vpack.c.b16 %v1547, %v1538
      %v1611 = vpack.c.b16 %v1548, %v1539
      %v1612 = vpack.c.b16 %v1549, %v1540
      %v1613 = vpack.c.b16 %v1559, %v1550
      %v1614 = vpack.c.b16 %v1560, %v1551
      %v1615 = vpack.c.b16 %v1561, %v1552
      %v1616 = vpack.c.b16 %v1562, %v1553
      %v1617 = vpack.c.b16 %v1563, %v1554
      %v1618 = vpack.c.b16 %v1564, %v1555
      %v1619 = vpack.c.b16 %v1565, %v1556
      %v1620 = vpack.c.b16 %v1566, %v1557
      %v1621 = vpack.c.b16 %v1567, %v1558
      %v1622 = vpack.c.b16 %v1577, %v1568
      %v1623 = vpack.c.b16 %v1578, %v1569
      %v1624 = vpack.c.b16 %v1579, %v1570
      %v1625 = vpack.c.b16 %v1580, %v1571
      %v1626 = vpack.c.b16 %v1581, %v1572
      %v1627 = vpack.c.b16 %v1582, %v1573
      %v1628 = vpack.c.b16 %v1583, %v1574
      %v1629 = vpack.c.b16 %v1584, %v1575
      %v1630 = vpack.c.b16 %v1585, %v1576
      %v1631 = vpack.c.b16 %v1595, %v1586
      %v1632 = vpack.c.b16 %v1596, %v1587
      %v1633 = vpack.c.b16 %v1597, %v1588
      %v1634 = vpack.c.b16 %v1598, %v1589
      %v1635 = vpack.c.b16 %v1599, %v1590
      %v1636 = vpack.c.b16 %v1600, %v1591
      %v1637 = vpack.c.b16 %v1601, %v1592
      %v1638 = vpack.c.b16 %v1602, %v1593
      %v1639 = vpack.c.b16 %v1603, %v1594
      %v1820 = vunpack.c.l.b16 %v1341
      %v1821 = vunpack.c.l.b16 %v1342
      %v1822 = vunpack.c.l.b16 %v1343
      %v1823 = vunpack.c.l.b16 %v1344
      %v1824 = vunpack.c.l.b16 %v1345
      %v1825 = vunpack.c.l.b16 %v1346
      %v1826 = vunpack.c.l.b16 %v1347
      %v1827 = vunpack.c.l.b16 %v1348
      %v1828 = vunpack.c.l.b16 %v1349
      %v1829 = vunpack.c.l.b16 %v1350
      %v1830 = vunpack.c.l.b16 %v1351
      %v1831 = vunpack.c.l.b16 %v1352
      %v1832 = vunpack.c.l.b16 %v1353
      %v1833 = vunpack.c.l.b16 %v1354
      %v1834 = vunpack.c.l.b16 %v1355
      %v1835 = vunpack.c.l.b16 %v1356
      %v1836 = vunpack.c.l.b16 %v1357
      %v1837 = vunpack.c.l.b16 %v1358
      %v1838 = vunpack.c.l.b16 %v1359
      %v1839 = vunpack.c.l.b16 %v1360
      %v1840 = vunpack.c.l.b16 %v1361
      %v1841 = vunpack.c.l.b16 %v1362
      %v1842 = vunpack.c.l.b16 %v1363
      %v1843 = vunpack.c.l.b16 %v1364
      %v1844 = vunpack.c.l.b16 %v1365
      %v1845 = vunpack.c.l.b16 %v1366
      %v1846 = vunpack.c.l.b16 %v1367
      %v1847 = vunpack.c.l.b16 %v1368
      %v1848 = vunpack.c.l.b16 %v1369
      %v1849 = vunpack.c.l.b16 %v1370
      %v1850 = vunpack.c.l.b16 %v1371
      %v1851 = vunpack.c.l.b16 %v1372
      %v1852 = vunpack.c.l.b16 %v1373
      %v1853 = vunpack.c.l.b16 %v1374
      %v1854 = vunpack.c.l.b16 %v1375
      %v1855 = vunpack.c.l.b16 %v1376
      %v1856 = vunpack.c.l.b16 %v1377
      %v1857 = vunpack.c.l.b16 %v1378
      %v1858 = vunpack.c.l.b16 %v1379
      %v1859 = vunpack.c.l.b16 %v1380
      %v1860 = vunpack.c.l.b16 %v1381
      %v1861 = vunpack.c.l.b16 %v1382
      %v1862 = vunpack.c.l.b16 %v1383
      %v1863 = vunpack.c.l.b16 %v1384
      %v1864 = vunpack.c.l.b16 %v1385
      %v1865 = vunpack.c.l.b16 %v1386
      %v1866 = vunpack.c.l.b16 %v1387
      %v1867 = vunpack.c.l.b16 %v1388
      %v1868 = vunpack.c.l.b16 %v1389
      %v1869 = vunpack.c.l.b16 %v1390
      %v1870 = vunpack.c.l.b16 %v1391
      %v1871 = vunpack.c.l.b16 %v1392
      %v1872 = vunpack.c.l.b16 %v1393
      %v1873 = vunpack.c.l.b16 %v1394
      %v1874 = vunpack.c.l.b16 %v1395
      %v1875 = vunpack.c.l.b16 %v1396
      %v1876 = vunpack.c.l.b16 %v1397
      %v1877 = vunpack.c.l.b16 %v1398
      %v1878 = vunpack.c.l.b16 %v1399
      %v1879 = vunpack.c.l.b16 %v1400
      %v1880 = vunpack.c.l.b16 %v1401
      %v1881 = vunpack.c.l.b16 %v1402
      %v1882 = vunpack.c.l.b16 %v1403
      %v1883 = vunpack.c.l.b16 %v1404
      %v1884 = vunpack.c.l.b16 %v1405
      %v1885 = vunpack.c.l.b16 %v1406
      %v1886 = vunpack.c.l.b16 %v1407
      %v1887 = vunpack.c.l.b16 %v1408
      %v1888 = vunpack.c.l.b16 %v1409
      %v1889 = vunpack.c.l.b16 %v1410
      %v1890 = vunpack.c.l.b16 %v1411
      %v1891 = vunpack.c.l.b16 %v1412
      %v1892 = vunpack.c.l.b16 %v1413
      %v1893 = vunpack.c.l.b16 %v1414
      %v1894 = vunpack.c.l.b16 %v1415
      %v1895 = vunpack.c.l.b16 %v1416
      %v1896 = vunpack.c.l.b16 %v1417
      %v1897 = vunpack.c.l.b16 %v1418
      %v1898 = vunpack.c.l.b16 %v1419
      %v1899 = vunpack.c.l.b16 %v1420
      %v1900 = vunpack.c.l.b16 %v1421
      %v1901 = vunpack.c.l.b16 %v1422
      %v1902 = vunpack.c.l.b16 %v1423
      %v1903 = vunpack.c.l.b16 %v1424
      %v1904 = vunpack.c.l.b16 %v1425
      %v1905 = vunpack.c.l.b16 %v1426
      %v1906 = vunpack.c.l.b16 %v1427
      %v1907 = vunpack.c.l.b16 %v1428
      %v1908 = vunpack.c.l.b16 %v1429
      %v1909 = vunpack.c.l.b16 %v1430
      %v1910 = vunpack.c.l.b16 %v1431
      %v1911 = vunpack.c.l.b16 %v1432
      %v1912 = vunpack.c.l.b16 %v1433
      %v1913 = vunpack.c.l.b16 %v1434
      %v1914 = vunpack.c.l.b16 %v1435
      %v1915 = vunpack.c.l.b16 %v1436
      %v1916 = vunpack.c.l.b16 %v1437
      %v1917 = vunpack.c.l.b16 %v1438
      %v1918 = vunpack.c.l.b16 %v1439
      %v1919 = vunpack.c.l.b16 %v1440
      %v1920 = vunpack.c.l.b16 %v1441
      %v1921 = vunpack.c.l.b16 %v1442
      %v1922 = vunpack.c.l.b16 %v1443
      %v1923 = vunpack.c.l.b16 %v1444
      %v1924 = vunpack.c.l.b16 %v1445
      %v1925 = vunpack.c.l.b16 %v1446
      %v1926 = vunpack.c.l.b16 %v1447
      %v1927 = vunpack.c.l.b16 %v1448
      %v1928 = vunpack.c.l.b16 %v1449
      %v1929 = vunpack.c.l.b16 %v1450
      %v1930 = vunpack.c.l.b16 %v1451
      %v1931 = vunpack.c.l.b16 %v1452
      %v1932 = vunpack.c.l.b16 %v1453
      %v1933 = vunpack.c.l.b16 %v1454
      %v1934 = vunpack.c.l.b16 %v1455
      %v1935 = vunpack.c.l.b16 %v1456
      %v1936 = vunpack.c.l.b16 %v1457
      %v1937 = vunpack.c.l.b16 %v1458
      %v1938 = vunpack.c.l.b16 %v1459
      %v1939 = vunpack.c.l.b16 %v1460
      %v1940 = vunpack.c.l.b16 %v1461
      %v1941 = vunpack.c.l.b16 %v1462
      %v1942 = vunpack.c.l.b16 %v1463
      %v1943 = vunpack.c.l.b16 %v1464
      %v1944 = vunpack.c.l.b16 %v1465
      %v1945 = vunpack.c.l.b16 %v1466
      %v1946 = vunpack.c.l.b16 %v1467
      %v1947 = vunpack.c.l.b16 %v1468
      %v1948 = vunpack.c.l.b16 %v1469
      %v1949 = vunpack.c.l.b16 %v1470
      %v1950 = vunpack.c.l.b16 %v1471
      %v1951 = vunpack.c.l.b16 %v1472
      %v1952 = vunpack.c.l.b16 %v1473
      %v1953 = vunpack.c.l.b16 %v1474
      %v1954 = vunpack.c.l.b16 %v1475
      %v1955 = vunpack.c.l.b16 %v1476
      %v1956 = vunpack.c.l.b16 %v1477
      %v1957 = vunpack.c.l.b16 %v1478
      %v1958 = vunpack.c.l.b16 %v1479
      %v1959 = vunpack.c.l.b16 %v1480
      %v1960 = vunpack.c.l.b16 %v1481
      %v1961 = vunpack.c.l.b16 %v1482
      %v1962 = vunpack.c.l.b16 %v1483
      %v1963 = vunpack.c.l.b16 %v1484
      %v1964 = vpack.c.b16 %v1821, %v1820
      %v1965 = vpack.c.b16 %v1823, %v1822
      %v1966 = vpack.c.b16 %v1825, %v1824
      %v1967 = vpack.c.b16 %v1827, %v1826
      %v1968 = vpack.c.b16 %v1829, %v1828
      %v1969 = vpack.c.b16 %v1831, %v1830
      %v1970 = vpack.c.b16 %v1833, %v1832
      %v1971 = vpack.c.b16 %v1835, %v1834
      %v1972 = vpack.c.b16 %v1837, %v1836
      %v1973 = vpack.c.b16 %v1839, %v1838
      %v1974 = vpack.c.b16 %v1841, %v1840
      %v1975 = vpack.c.b16 %v1843, %v1842
      %v1976 = vpack.c.b16 %v1845, %v1844
      %v1977 = vpack.c.b16 %v1847, %v1846
      %v1978 = vpack.c.b16 %v1849, %v1848
      %v1979 = vpack.c.b16 %v1851, %v1850
      %v1980 = vpack.c.b16 %v1853, %v1852
      %v1981 = vpack.c.b16 %v1855, %v1854
      %v1982 = vpack.c.b16 %v1857, %v1856
      %v1983 = vpack.c.b16 %v1859, %v1858
      %v1984 = vpack.c.b16 %v1861, %v1860
      %v1985 = vpack.c.b16 %v1863, %v1862
      %v1986 = vpack.c.b16 %v1865, %v1864
      %v1987 = vpack.c.b16 %v1867, %v1866
      %v1988 = vpack.c.b16 %v1869, %v1868
      %v1989 = vpack.c.b16 %v1871, %v1870
      %v1990 = vpack.c.b16 %v1873, %v1872
      %v1991 = vpack.c.b16 %v1875, %v1874
      %v1992 = vpack.c.b16 %v1877, %v1876
      %v1993 = vpack.c.b16 %v1879, %v1878
      %v1994 = vpack.c.b16 %v1881, %v1880
      %v1995 = vpack.c.b16 %v1883, %v1882
      %v1996 = vpack.c.b16 %v1885, %v1884
      %v1997 = vpack.c.b16 %v1887, %v1886
      %v1998 = vpack.c.b16 %v1889, %v1888
      %v1999 = vpack.c.b16 %v1891, %v1890
      %v2000 = vpack.c.b16 %v1893, %v1892
      %v2001 = vpack.c.b16 %v1895, %v1894
      %v2002 = vpack.c.b16 %v1897, %v1896
      %v2003 = vpack.c.b16 %v1899, %v1898
      %v2004 = vpack.c.b16 %v1901, %v1900
      %v2005 = vpack.c.b16 %v1903, %v1902
      %v2006 = vpack.c.b16 %v1905, %v1904
      %v2007 = vpack.c.b16 %v1907, %v1906
      %v2008 = vpack.c.b16 %v1909, %v1908
      %v2009 = vpack.c.b16 %v1911, %v1910
      %v2010 = vpack.c.b16 %v1913, %v1912
      %v2011 = vpack.c.b16 %v1915, %v1914
      %v2012 = vpack.c.b16 %v1917, %v1916
      %v2013 = vpack.c.b16 %v1919, %v1918
      %v2014 = vpack.c.b16 %v1921, %v1920
      %v2015 = vpack.c.b16 %v1923, %v1922
      %v2016 = vpack.c.b16 %v1925, %v1924
      %v2017 = vpack.c.b16 %v1927, %v1926
      %v2018 = vpack.c.b16 %v1929, %v1928
      %v2019 = vpack.c.b16 %v1931, %v1930
      %v2020 = vpack.c.b16 %v1933, %v1932
      %v2021 = vpack.c.b16 %v1935, %v1934
      %v2022 = vpack.c.b16 %v1937, %v1936
      %v2023 = vpack.c.b16 %v1939, %v1938
      %v2024 = vpack.c.b16 %v1941, %v1940
      %v2025 = vpack.c.b16 %v1943, %v1942
      %v2026 = vpack.c.b16 %v1945, %v1944
      %v2027 = vpack.c.b16 %v1947, %v1946
      %v2028 = vpack.c.b16 %v1949, %v1948
      %v2029 = vpack.c.b16 %v1951, %v1950
      %v2030 = vpack.c.b16 %v1953, %v1952
      %v2031 = vpack.c.b16 %v1955, %v1954
      %v2032 = vpack.c.b16 %v1957, %v1956
      %v2033 = vpack.c.b16 %v1959, %v1958
      %v2034 = vpack.c.b16 %v1961, %v1960
      %v2035 = vpack.c.b16 %v1963, %v1962
      %2108 = vmatprep.subr.bf16.mxu0 0
      %2109 = vmatpush1.bf16.msra.mxu0 %v1971
      %2110 = vmatprep.subr.bf16.mxu0 0
      %2111 = vmatpush1.bf16.msra.mxu0 %v1970
      %2112 = vmatprep.subr.bf16.mxu0 0
      %2113 = vmatpush1.bf16.msra.mxu0 %v1969
      %2114 = vmatprep.subr.bf16.mxu0 0
      %2115 = vmatpush1.bf16.msra.mxu0 %v1968
      %2116 = vmatprep.subr.bf16.mxu0 0
      %2117 = vmatpush1.bf16.msra.mxu0 %v1967
      %2118 = vmatprep.subr.bf16.mxu0 0
      %2119 = vmatpush1.bf16.msra.mxu0 %v1966
      %2120 = vmatprep.subr.bf16.mxu0 0
      %2121 = vmatpush1.bf16.msra.mxu0 %v1965
      %2122 = vmatprep.subr.bf16.mxu0 0
      %2123 = vmatpush1.bf16.msra.mxu0 %v1964
      %2124 = vmatprep.subr.bf16.mxu0 0
      %2125 = vmatpush2.bf16.msra.mxu0 %v1979
      %2126 = vmatprep.subr.bf16.mxu0 0
      %2127 = vmatpush2.bf16.msra.mxu0 %v1978
      %2128 = vmatprep.subr.bf16.mxu0 0
      %2129 = vmatpush2.bf16.msra.mxu0 %v1977
      %2130 = vmatprep.subr.bf16.mxu0 0
      %2131 = vmatpush2.bf16.msra.mxu0 %v1976
      %2132 = vmatprep.subr.bf16.mxu0 0
      %2133 = vmatpush2.bf16.msra.mxu0 %v1975
      %2134 = vmatprep.subr.bf16.mxu0 0
      %2135 = vmatpush2.bf16.msra.mxu0 %v1974
      %2136 = vmatprep.subr.bf16.mxu0 0
      %2137 = vmatpush2.bf16.msra.mxu0 %v1973
      %2138 = vmatprep.subr.bf16.mxu0 0
      %2139 = vmatpush2.bf16.msra.mxu0 %v1972
      %2140 = vmatprep.mubr.bf16.mxu0 %v1605
      %2141 = vmatmul.mubr.bf16.gmra.mxu0 %v1604
      %v2142 = vpop.f32.mrf.mxu0
      %v2143 = vadd.f32 %v1490, %v2142
      %v2144 = vpop.f32.mrf.mxu0
      %v2145 = vpop.f32.mrf.mxu0
      %v2146 = vadd.f32 %v1490, %v2145
      %v2147 = vpop.f32.mrf.mxu0
      %2148 = vmatprep.mubr.bf16.mxu0 %v1614
      %2149 = vmatmul.mubr.bf16.gmra.mxu0 %v1613
      %v2150 = vpop.f32.mrf.mxu0
      %v2151 = vadd.f32 %v1490, %v2150
      %v2152 = vpop.f32.mrf.mxu0
      %v2153 = vpop.f32.mrf.mxu0
      %v2154 = vadd.f32 %v1490, %v2153
      %v2155 = vpop.f32.mrf.mxu0
      %2156 = vmatprep.mubr.bf16.mxu0 %v1623
      %2157 = vmatmul.mubr.bf16.gmra.mxu0 %v1622
      %v2158 = vpop.f32.mrf.mxu0
      %v2159 = vadd.f32 %v1490, %v2158
      %v2160 = vpop.f32.mrf.mxu0
      %v2161 = vpop.f32.mrf.mxu0
      %v2162 = vadd.f32 %v1490, %v2161
      %v2163 = vpop.f32.mrf.mxu0
      %2164 = vmatprep.mubr.bf16.mxu0 %v1632
      %2165 = vmatmul.mubr.bf16.gmra.mxu0 %v1631
      %v2166 = vpop.f32.mrf.mxu0
      %v2167 = vadd.f32 %v1490, %v2166
      %v2168 = vpop.f32.mrf.mxu0
      %v2169 = vpop.f32.mrf.mxu0
      %v2170 = vadd.f32 %v1490, %v2169
      %v2171 = vpop.f32.mrf.mxu0
      %2172 = vdwg.mxu0
      %2173 = vmatprep.subr.bf16.mxu0 0
      %2174 = vmatpush1.bf16.msra.mxu0 %v1987
      %2175 = vmatprep.subr.bf16.mxu0 0
      %2176 = vmatpush1.bf16.msra.mxu0 %v1986
      %2177 = vmatprep.subr.bf16.mxu0 0
      %2178 = vmatpush1.bf16.msra.mxu0 %v1985
      %2179 = vmatprep.subr.bf16.mxu0 0
      %2180 = vmatpush1.bf16.msra.mxu0 %v1984
      %2181 = vmatprep.subr.bf16.mxu0 0
      %2182 = vmatpush1.bf16.msra.mxu0 %v1983
      %2183 = vmatprep.subr.bf16.mxu0 0
      %2184 = vmatpush1.bf16.msra.mxu0 %v1982
      %2185 = vmatprep.subr.bf16.mxu0 0
      %2186 = vmatpush1.bf16.msra.mxu0 %v1981
      %2187 = vmatprep.subr.bf16.mxu0 0
      %2188 = vmatpush1.bf16.msra.mxu0 %v1980
      %2189 = vmatprep.subr.bf16.mxu0 0
      %2190 = vmatpush2.bf16.msra.mxu0 %v1995
      %2191 = vmatprep.subr.bf16.mxu0 0
      %2192 = vmatpush2.bf16.msra.mxu0 %v1994
      %2193 = vmatprep.subr.bf16.mxu0 0
      %2194 = vmatpush2.bf16.msra.mxu0 %v1993
      %2195 = vmatprep.subr.bf16.mxu0 0
      %2196 = vmatpush2.bf16.msra.mxu0 %v1992
      %2197 = vmatprep.subr.bf16.mxu0 0
      %2198 = vmatpush2.bf16.msra.mxu0 %v1991
      %2199 = vmatprep.subr.bf16.mxu0 0
      %2200 = vmatpush2.bf16.msra.mxu0 %v1990
      %2201 = vmatprep.subr.bf16.mxu0 0
      %2202 = vmatpush2.bf16.msra.mxu0 %v1989
      %2203 = vmatprep.subr.bf16.mxu0 0
      %2204 = vmatpush2.bf16.msra.mxu0 %v1988
      %2205 = vmatprep.mubr.bf16.mxu0 %v1607
      %2206 = vmatmul.mubr.bf16.gmra.mxu0 %v1606
      %v2207 = vpop.f32.mrf.mxu0
      %v2208 = vadd.f32 %v2143, %v2207
      %v2209 = vpop.f32.mrf.mxu0
      %v2210 = vpop.f32.mrf.mxu0
      %v2211 = vadd.f32 %v2146, %v2210
      %v2212 = vpop.f32.mrf.mxu0
      %2213 = vmatprep.mubr.bf16.mxu0 %v1616
      %2214 = vmatmul.mubr.bf16.gmra.mxu0 %v1615
      %v2215 = vpop.f32.mrf.mxu0
      %v2216 = vadd.f32 %v2151, %v2215
      %v2217 = vpop.f32.mrf.mxu0
      %v2218 = vpop.f32.mrf.mxu0
      %v2219 = vadd.f32 %v2154, %v2218
      %v2220 = vpop.f32.mrf.mxu0
      %2221 = vmatprep.mubr.bf16.mxu0 %v1625
      %2222 = vmatmul.mubr.bf16.gmra.mxu0 %v1624
      %v2223 = vpop.f32.mrf.mxu0
      %v2224 = vadd.f32 %v2159, %v2223
      %v2225 = vpop.f32.mrf.mxu0
      %v2226 = vpop.f32.mrf.mxu0
      %v2227 = vadd.f32 %v2162, %v2226
      %v2228 = vpop.f32.mrf.mxu0
      %2229 = vmatprep.mubr.bf16.mxu0 %v1634
      %2230 = vmatmul.mubr.bf16.gmra.mxu0 %v1633
      %v2231 = vpop.f32.mrf.mxu0
      %v2232 = vadd.f32 %v2167, %v2231
      %v2233 = vpop.f32.mrf.mxu0
      %v2234 = vpop.f32.mrf.mxu0
      %v2235 = vadd.f32 %v2170, %v2234
      %v2236 = vpop.f32.mrf.mxu0
      %2237 = vdwg.mxu0
      %2238 = vmatprep.subr.bf16.mxu0 0
      %2239 = vmatpush1.bf16.msra.mxu0 %v2003
      %2240 = vmatprep.subr.bf16.mxu0 0
      %2241 = vmatpush1.bf16.msra.mxu0 %v2002
      %2242 = vmatprep.subr.bf16.mxu0 0
      %2243 = vmatpush1.bf16.msra.mxu0 %v2001
      %2244 = vmatprep.subr.bf16.mxu0 0
      %2245 = vmatpush1.bf16.msra.mxu0 %v2000
      %2246 = vmatprep.subr.bf16.mxu0 0
      %2247 = vmatpush1.bf16.msra.mxu0 %v1999
      %2248 = vmatprep.subr.bf16.mxu0 0
      %2249 = vmatpush1.bf16.msra.mxu0 %v1998
      %2250 = vmatprep.subr.bf16.mxu0 0
      %2251 = vmatpush1.bf16.msra.mxu0 %v1997
      %2252 = vmatprep.subr.bf16.mxu0 0
      %2253 = vmatpush1.bf16.msra.mxu0 %v1996
      %2254 = vmatprep.subr.bf16.mxu0 0
      %2255 = vmatpush2.bf16.msra.mxu0 %v2011
      %2256 = vmatprep.subr.bf16.mxu0 0
      %2257 = vmatpush2.bf16.msra.mxu0 %v2010
      %2258 = vmatprep.subr.bf16.mxu0 0
      %2259 = vmatpush2.bf16.msra.mxu0 %v2009
      %2260 = vmatprep.subr.bf16.mxu0 0
      %2261 = vmatpush2.bf16.msra.mxu0 %v2008
      %2262 = vmatprep.subr.bf16.mxu0 0
      %2263 = vmatpush2.bf16.msra.mxu0 %v2007
      %2264 = vmatprep.subr.bf16.mxu0 0
      %2265 = vmatpush2.bf16.msra.mxu0 %v2006
      %2266 = vmatprep.subr.bf16.mxu0 0
      %2267 = vmatpush2.bf16.msra.mxu0 %v2005
      %2268 = vmatprep.subr.bf16.mxu0 0
      %2269 = vmatpush2.bf16.msra.mxu0 %v2004
      %2270 = vmatprep.mubr.bf16.mxu0 %v1609
      %2271 = vmatmul.mubr.bf16.gmra.mxu0 %v1608
      %v2272 = vpop.f32.mrf.mxu0
      %v2273 = vadd.f32 %v2208, %v2272
      %v2274 = vpop.f32.mrf.mxu0
      %v2275 = vpop.f32.mrf.mxu0
      %v2276 = vadd.f32 %v2211, %v2275
      %v2277 = vpop.f32.mrf.mxu0
      %2278 = vmatprep.mubr.bf16.mxu0 %v1618
      %2279 = vmatmul.mubr.bf16.gmra.mxu0 %v1617
      %v2280 = vpop.f32.mrf.mxu0
      %v2281 = vadd.f32 %v2216, %v2280
      %v2282 = vpop.f32.mrf.mxu0
      %v2283 = vpop.f32.mrf.mxu0
      %v2284 = vadd.f32 %v2219, %v2283
      %v2285 = vpop.f32.mrf.mxu0
      %2286 = vmatprep.mubr.bf16.mxu0 %v1627
      %2287 = vmatmul.mubr.bf16.gmra.mxu0 %v1626
      %v2288 = vpop.f32.mrf.mxu0
      %v2289 = vadd.f32 %v2224, %v2288
      %v2290 = vpop.f32.mrf.mxu0
      %v2291 = vpop.f32.mrf.mxu0
      %v2292 = vadd.f32 %v2227, %v2291
      %v2293 = vpop.f32.mrf.mxu0
      %2294 = vmatprep.mubr.bf16.mxu0 %v1636
      %2295 = vmatmul.mubr.bf16.gmra.mxu0 %v1635
      %v2296 = vpop.f32.mrf.mxu0
      %v2297 = vadd.f32 %v2232, %v2296
      %v2298 = vpop.f32.mrf.mxu0
      %v2299 = vpop.f32.mrf.mxu0
      %v2300 = vadd.f32 %v2235, %v2299
      %v2301 = vpop.f32.mrf.mxu0
      %2302 = vdwg.mxu0
      %2303 = vmatprep.subr.bf16.mxu0 0
      %2304 = vmatpush1.bf16.msra.mxu0 %v2019
      %2305 = vmatprep.subr.bf16.mxu0 0
      %2306 = vmatpush1.bf16.msra.mxu0 %v2018
      %2307 = vmatprep.subr.bf16.mxu0 0
      %2308 = vmatpush1.bf16.msra.mxu0 %v2017
      %2309 = vmatprep.subr.bf16.mxu0 0
      %2310 = vmatpush1.bf16.msra.mxu0 %v2016
      %2311 = vmatprep.subr.bf16.mxu0 0
      %2312 = vmatpush1.bf16.msra.mxu0 %v2015
      %2313 = vmatprep.subr.bf16.mxu0 0
      %2314 = vmatpush1.bf16.msra.mxu0 %v2014
      %2315 = vmatprep.subr.bf16.mxu0 0
      %2316 = vmatpush1.bf16.msra.mxu0 %v2013
      %2317 = vmatprep.subr.bf16.mxu0 0
      %2318 = vmatpush1.bf16.msra.mxu0 %v2012
      %2319 = vmatprep.subr.bf16.mxu0 0
      %2320 = vmatpush2.bf16.msra.mxu0 %v2027
      %2321 = vmatprep.subr.bf16.mxu0 0
      %2322 = vmatpush2.bf16.msra.mxu0 %v2026
      %2323 = vmatprep.subr.bf16.mxu0 0
      %2324 = vmatpush2.bf16.msra.mxu0 %v2025
      %2325 = vmatprep.subr.bf16.mxu0 0
      %2326 = vmatpush2.bf16.msra.mxu0 %v2024
      %2327 = vmatprep.subr.bf16.mxu0 0
      %2328 = vmatpush2.bf16.msra.mxu0 %v2023
      %2329 = vmatprep.subr.bf16.mxu0 0
      %2330 = vmatpush2.bf16.msra.mxu0 %v2022
      %2331 = vmatprep.subr.bf16.mxu0 0
      %2332 = vmatpush2.bf16.msra.mxu0 %v2021
      %2333 = vmatprep.subr.bf16.mxu0 0
      %2334 = vmatpush2.bf16.msra.mxu0 %v2020
      %2335 = vmatprep.mubr.bf16.mxu0 %v1611
      %2336 = vmatmul.mubr.bf16.gmra.mxu0 %v1610
      %v2337 = vpop.f32.mrf.mxu0
      %v2338 = vadd.f32 %v2273, %v2337
      %v2339 = vpop.f32.mrf.mxu0
      %v2340 = vpop.f32.mrf.mxu0
      %v2341 = vadd.f32 %v2276, %v2340
      %v2342 = vpop.f32.mrf.mxu0
      %2343 = vmatprep.mubr.bf16.mxu0 %v1620
      %2344 = vmatmul.mubr.bf16.gmra.mxu0 %v1619
      %v2345 = vpop.f32.mrf.mxu0
      %v2346 = vadd.f32 %v2281, %v2345
      %v2347 = vpop.f32.mrf.mxu0
      %v2348 = vpop.f32.mrf.mxu0
      %v2349 = vadd.f32 %v2284, %v2348
      %v2350 = vpop.f32.mrf.mxu0
      %2351 = vmatprep.mubr.bf16.mxu0 %v1629
      %2352 = vmatmul.mubr.bf16.gmra.mxu0 %v1628
      %v2353 = vpop.f32.mrf.mxu0
      %v2354 = vadd.f32 %v2289, %v2353
      %v2355 = vpop.f32.mrf.mxu0
      %v2356 = vpop.f32.mrf.mxu0
      %v2357 = vadd.f32 %v2292, %v2356
      %v2358 = vpop.f32.mrf.mxu0
      %2359 = vmatprep.mubr.bf16.mxu0 %v1638
      %2360 = vmatmul.mubr.bf16.gmra.mxu0 %v1637
      %v2361 = vpop.f32.mrf.mxu0
      %v2362 = vadd.f32 %v2297, %v2361
      %v2363 = vpop.f32.mrf.mxu0
      %v2364 = vpop.f32.mrf.mxu0
      %v2365 = vadd.f32 %v2300, %v2364
      %v2366 = vpop.f32.mrf.mxu0
      %2367 = vdwg.mxu0
      %2368 = vmatprep.subr.bf16.mxu0 0
      %2369 = vmatpush1.bf16.msra.mxu0 %v2035
      %2370 = vmatprep.subr.bf16.mxu0 0
      %2371 = vmatpush1.bf16.msra.mxu0 %v2034
      %2372 = vmatprep.subr.bf16.mxu0 0
      %2373 = vmatpush1.bf16.msra.mxu0 %v2033
      %2374 = vmatprep.subr.bf16.mxu0 0
      %2375 = vmatpush1.bf16.msra.mxu0 %v2032
      %2376 = vmatprep.subr.bf16.mxu0 0
      %2377 = vmatpush1.bf16.msra.mxu0 %v2031
      %2378 = vmatprep.subr.bf16.mxu0 0
      %2379 = vmatpush1.bf16.msra.mxu0 %v2030
      %2380 = vmatprep.subr.bf16.mxu0 0
      %2381 = vmatpush1.bf16.msra.mxu0 %v2029
      %2382 = vmatprep.subr.bf16.mxu0 0
      %2383 = vmatpush1.bf16.msra.mxu0 %v2028
      %2384 = vmatprep.subr.bf16.mxu0 0
      %2385 = vmatpush2.bf16.msra.mxu0 0
      %2386 = vmatprep.subr.bf16.mxu0 0
      %2387 = vmatpush2.bf16.msra.mxu0 0
      %2388 = vmatprep.subr.bf16.mxu0 0
      %2389 = vmatpush2.bf16.msra.mxu0 0
      %2390 = vmatprep.subr.bf16.mxu0 0
      %2391 = vmatpush2.bf16.msra.mxu0 0
      %2392 = vmatprep.subr.bf16.mxu0 0
      %2393 = vmatpush2.bf16.msra.mxu0 0
      %2394 = vmatprep.subr.bf16.mxu0 0
      %2395 = vmatpush2.bf16.msra.mxu0 0
      %2396 = vmatprep.subr.bf16.mxu0 0
      %2397 = vmatpush2.bf16.msra.mxu0 0
      %2398 = vmatprep.subr.bf16.mxu0 0
      %2399 = vmatpush2.bf16.msra.mxu0 0
      %2400 = vmatprep.mubr.bf16.mxu0 0
      %2401 = vmatmul.mubr.bf16.gmra.mxu0 %v1612
      %v2402 = vpop.f32.mrf.mxu0
      %v2403 = vadd.f32 %v2338, %v2402
      %v2404 = vpop.f32.mrf.mxu0
      %v2405 = vpop.f32.mrf.mxu0
      %v2406 = vadd.f32 %v2341, %v2405
      %v2407 = vpop.f32.mrf.mxu0
      %2408 = vmatprep.mubr.bf16.mxu0 0
      %2409 = vmatmul.mubr.bf16.gmra.mxu0 %v1621
      %v2410 = vpop.f32.mrf.mxu0
      %v2411 = vadd.f32 %v2346, %v2410
      %v2412 = vpop.f32.mrf.mxu0
      %v2413 = vpop.f32.mrf.mxu0
      %v2414 = vadd.f32 %v2349, %v2413
      %v2415 = vpop.f32.mrf.mxu0
      %2416 = vmatprep.mubr.bf16.mxu0 0
      %2417 = vmatmul.mubr.bf16.gmra.mxu0 %v1630
      %v2418 = vpop.f32.mrf.mxu0
      %v2419 = vadd.f32 %v2354, %v2418
      %v2420 = vpop.f32.mrf.mxu0
      %v2421 = vpop.f32.mrf.mxu0
      %v2422 = vadd.f32 %v2357, %v2421
      %v2423 = vpop.f32.mrf.mxu0
      %2424 = vmatprep.mubr.bf16.mxu0 0
      %2425 = vmatmul.mubr.bf16.gmra.mxu0 %v1639
      %v2426 = vpop.f32.mrf.mxu0
      %v2427 = vadd.f32 %v2362, %v2426
      %v2428 = vpop.f32.mrf.mxu0
      %v2429 = vpop.f32.mrf.mxu0
      %v2430 = vadd.f32 %v2365, %v2429
      %v2431 = vpop.f32.mrf.mxu0
      %2432 = vdwg.mxu0
      %v2433 = vmax.f32 %v2403, 0.0
      %v2434 = vmax.f32 %v2406, 0.0
      %v2435 = vmax.f32 %v2411, 0.0
      %v2436 = vmax.f32 %v2414, 0.0
      %v2437 = vmax.f32 %v2419, 0.0
      %v2438 = vmax.f32 %v2422, 0.0
      %v2439 = vmax.f32 %v2427, 0.0
      %v2440 = vmax.f32 %v2430, 0.0
      %v2441 = vpack.c.bf16 %v2434, %v2433
      %v2442 = vpack.c.bf16 %v2436, %v2435
      %v2443 = vpack.c.bf16 %v2438, %v2437
      %v2444 = vpack.c.bf16 %v2440, %v2439
      %v2445 = vld [vmem:[%s7] sm:$0xf]
      %v2446 = vld [vmem:[%s7 + $0x4] sm:$0xf]
      %v2447 = vld [vmem:[%s7 + $0x8] sm:$0xf]
      %v2448 = vld [vmem:[%s7 + $0xc] sm:$0xf]
      %v2449 = vld [vmem:[%s7 + $0x10] sm:$0xf]
      %v2450 = vld [vmem:[%s7 + $0x14] sm:$0xf]
      %v2451 = vld [vmem:[%s7 + $0x18] sm:$0xf]
      %v2452 = vld [vmem:[%s7 + $0x1c] sm:$0xf]
      %v2453 = vld [vmem:[%s7 + $0x20] sm:$0xf]
      %v2454 = vld [vmem:[%s7 + $0x24] sm:$0xf]
      %v2455 = vld [vmem:[%s7 + $0x28] sm:$0xf]
      %v2456 = vld [vmem:[%s7 + $0x2c] sm:$0xf]
      %v2457 = vld [vmem:[%s7 + $0x30] sm:$0xf]
      %v2458 = vld [vmem:[%s7 + $0x34] sm:$0xf]
      %v2459 = vld [vmem:[%s7 + $0x38] sm:$0xf]
      %v2460 = vld [vmem:[%s7 + $0x3c] sm:$0xf]
      %v2461 = vld [vmem:[%s452] sm:$0xf]
      %v2462 = vld [vmem:[%s452 + $0x4] sm:$0xf]
      %v2463 = vld [vmem:[%s452 + $0x8] sm:$0xf]
      %v2464 = vld [vmem:[%s452 + $0xc] sm:$0xf]
      %v2465 = vld [vmem:[%s452 + $0x10] sm:$0xf]
      %v2466 = vld [vmem:[%s452 + $0x14] sm:$0xf]
      %v2467 = vld [vmem:[%s452 + $0x18] sm:$0xf]
      %v2468 = vld [vmem:[%s452 + $0x1c] sm:$0xf]
      %v2469 = vunpack.c.l.bf16 %v2461
      %v2470 = vunpack.c.l.bf16 %v2462
      %v2471 = vunpack.c.l.bf16 %v2463
      %v2472 = vunpack.c.l.bf16 %v2464
      %v2473 = vunpack.c.l.bf16 %v2465
      %v2474 = vunpack.c.l.bf16 %v2466
      %v2475 = vunpack.c.l.bf16 %v2467
      %v2476 = vunpack.c.l.bf16 %v2468
      %v2477 = vld [vmem:[%s8] sm:$0x1]
      %v2479 = vlaneseq
      %v2480 = vshrl.u32 %v2479, 7
      %v2481 = vsub.s32 0, %v2480
      %v2482 = vrot.slane %v2477, %v2481
      %v2500 = vunpack.c.l.b16 %v2445
      %v2501 = vunpack.c.l.b16 %v2446
      %v2502 = vunpack.c.l.b16 %v2447
      %v2503 = vunpack.c.l.b16 %v2448
      %v2504 = vunpack.c.l.b16 %v2449
      %v2505 = vunpack.c.l.b16 %v2450
      %v2506 = vunpack.c.l.b16 %v2451
      %v2507 = vunpack.c.l.b16 %v2452
      %v2508 = vunpack.c.l.b16 %v2453
      %v2509 = vunpack.c.l.b16 %v2454
      %v2510 = vunpack.c.l.b16 %v2455
      %v2511 = vunpack.c.l.b16 %v2456
      %v2512 = vunpack.c.l.b16 %v2457
      %v2513 = vunpack.c.l.b16 %v2458
      %v2514 = vunpack.c.l.b16 %v2459
      %v2515 = vunpack.c.l.b16 %v2460
      %v2516 = vpack.c.b16 %v2501, %v2500
      %v2517 = vpack.c.b16 %v2503, %v2502
      %v2518 = vpack.c.b16 %v2505, %v2504
      %v2519 = vpack.c.b16 %v2507, %v2506
      %v2520 = vpack.c.b16 %v2509, %v2508
      %v2521 = vpack.c.b16 %v2511, %v2510
      %v2522 = vpack.c.b16 %v2513, %v2512
      %v2523 = vpack.c.b16 %v2515, %v2514
      %2532 = vmatprep.subr.bf16.mxu0 0
      %2533 = vmatpush1.bf16.msra.mxu0 %v2523
      %2534 = vmatprep.subr.bf16.mxu0 0
      %2535 = vmatpush1.bf16.msra.mxu0 %v2522
      %2536 = vmatprep.subr.bf16.mxu0 0
      %2537 = vmatpush1.bf16.msra.mxu0 %v2521
      %2538 = vmatprep.subr.bf16.mxu0 0
      %2539 = vmatpush1.bf16.msra.mxu0 %v2520
      %2540 = vmatprep.subr.bf16.mxu0 0
      %2541 = vmatpush1.bf16.msra.mxu0 %v2519
      %2542 = vmatprep.subr.bf16.mxu0 0
      %2543 = vmatpush1.bf16.msra.mxu0 %v2518
      %2544 = vmatprep.subr.bf16.mxu0 0
      %2545 = vmatpush1.bf16.msra.mxu0 %v2517
      %2546 = vmatprep.subr.bf16.mxu0 0
      %2547 = vmatpush1.bf16.msra.mxu0 %v2516
      %2548 = vmatprep.subr.bf16.mxu0 0
      %2549 = vmatpush2.bf16.msra.mxu0 0
      %2550 = vmatprep.subr.bf16.mxu0 0
      %2551 = vmatpush2.bf16.msra.mxu0 0
      %2552 = vmatprep.subr.bf16.mxu0 0
      %2553 = vmatpush2.bf16.msra.mxu0 0
      %2554 = vmatprep.subr.bf16.mxu0 0
      %2555 = vmatpush2.bf16.msra.mxu0 0
      %2556 = vmatprep.subr.bf16.mxu0 0
      %2557 = vmatpush2.bf16.msra.mxu0 0
      %2558 = vmatprep.subr.bf16.mxu0 0
      %2559 = vmatpush2.bf16.msra.mxu0 0
      %2560 = vmatprep.subr.bf16.mxu0 0
      %2561 = vmatpush2.bf16.msra.mxu0 0
      %2562 = vmatprep.subr.bf16.mxu0 0
      %2563 = vmatpush2.bf16.msra.mxu0 0
      %2564 = vmatprep.mubr.bf16.mxu0 0
      %2565 = vmatmul.mubr.bf16.gmra.mxu0 %v2441
      %v2566 = vpop.f32.mrf.mxu0
      %v2567 = vadd.f32 %v2482, %v2566
      %v2568 = vpop.f32.mrf.mxu0
      %v2569 = vpop.f32.mrf.mxu0
      %v2570 = vadd.f32 %v2482, %v2569
      %v2571 = vpop.f32.mrf.mxu0
      %2572 = vmatprep.mubr.bf16.mxu0 0
      %2573 = vmatmul.mubr.bf16.gmra.mxu0 %v2442
      %v2574 = vpop.f32.mrf.mxu0
      %v2575 = vadd.f32 %v2482, %v2574
      %v2576 = vpop.f32.mrf.mxu0
      %v2577 = vpop.f32.mrf.mxu0
      %v2578 = vadd.f32 %v2482, %v2577
      %v2579 = vpop.f32.mrf.mxu0
      %2580 = vmatprep.mubr.bf16.mxu0 0
      %2581 = vmatmul.mubr.bf16.gmra.mxu0 %v2443
      %v2582 = vpop.f32.mrf.mxu0
      %v2583 = vadd.f32 %v2482, %v2582
      %v2584 = vpop.f32.mrf.mxu0
      %v2585 = vpop.f32.mrf.mxu0
      %v2586 = vadd.f32 %v2482, %v2585
      %v2587 = vpop.f32.mrf.mxu0
      %2588 = vmatprep.mubr.bf16.mxu0 0
      %2589 = vmatmul.mubr.bf16.gmra.mxu0 %v2444
      %v2590 = vpop.f32.mrf.mxu0
      %v2591 = vadd.f32 %v2482, %v2590
      %v2592 = vpop.f32.mrf.mxu0
      %v2593 = vpop.f32.mrf.mxu0
      %v2594 = vadd.f32 %v2482, %v2593
      %v2595 = vpop.f32.mrf.mxu0
      %2596 = vdwg.mxu0
      %v2597 = vadd.f32 %v2567, %v2469
      %v2598 = vadd.f32 %v2570, %v2470
      %v2599 = vadd.f32 %v2575, %v2471
      %v2600 = vadd.f32 %v2578, %v2472
      %v2601 = vadd.f32 %v2583, %v2473
      %v2602 = vadd.f32 %v2586, %v2474
      %v2603 = vadd.f32 %v2591, %v2475
      %v2604 = vadd.f32 %v2594, %v2476
      %v2605 = vmax.f32 %v2597, 0.0
      %v2606 = vmax.f32 %v2598, 0.0
      %v2607 = vmax.f32 %v2599, 0.0
      %v2608 = vmax.f32 %v2600, 0.0
      %v2609 = vmax.f32 %v2601, 0.0
      %v2610 = vmax.f32 %v2602, 0.0
      %v2611 = vmax.f32 %v2603, 0.0
      %v2612 = vmax.f32 %v2604, 0.0
      %v2613 = vpack.c.bf16 %v2606, %v2605
      %v2614 = vpack.c.bf16 %v2608, %v2607
      %v2615 = vpack.c.bf16 %v2610, %v2609
      %v2616 = vpack.c.bf16 %v2612, %v2611
      %v2621 = vunpack.c.l.b16 %v2613
      %v2622 = vunpack.c.h.b16 %v2613
      %v2623 = vunpack.c.l.b16 %v2614
      %v2624 = vunpack.c.h.b16 %v2614
      %v2625 = vunpack.c.l.b16 %v2615
      %v2626 = vunpack.c.h.b16 %v2615
      %v2627 = vunpack.c.l.b16 %v2616
      %v2628 = vunpack.c.h.b16 %v2616
      %v2629 = vpack.c.b16 %v2621, %v2621
      %v2630 = vpack.c.b16 %v2622, %v2622
      %v2631 = vpack.c.b16 %v2623, %v2623
      %v2632 = vpack.c.b16 %v2624, %v2624
      %v2633 = vpack.c.b16 %v2625, %v2625
      %v2634 = vpack.c.b16 %v2626, %v2626
      %v2635 = vpack.c.b16 %v2627, %v2627
      %v2636 = vpack.c.b16 %v2628, %v2628
      %vm2645 = vcmask 125952
      %2646 = vst.msk [vmem:[%s498] sm:$0xf] %vm2645, %v2629
      %2647 = vst.msk [vmem:[%s498 + $0x4] sm:$0xf] %vm2645, %v2630
      %2648 = vst.msk [vmem:[%s498 + $0x8] sm:$0xf] %vm2645, %v2631
      %2649 = vst.msk [vmem:[%s498 + $0xc] sm:$0xf] %vm2645, %v2632
      %2650 = vst.msk [vmem:[%s498 + $0x10] sm:$0xf] %vm2645, %v2633
      %2651 = vst.msk [vmem:[%s498 + $0x14] sm:$0xf] %vm2645, %v2634
      %2652 = vst.msk [vmem:[%s498 + $0x18] sm:$0xf] %vm2645, %v2635
      %2653 = vst.msk [vmem:[%s498 + $0x1c] sm:$0xf] %vm2645, %v2636
      %s2654 = smul.u32 8, %s25
      %p2655 = scmp.lt.s32.totalorder %s24, 1
      %s2656 = scalar_select %p2655, %s24, 1
      %p2657 = scmp.lt.s32.totalorder %s2654, 31
      %s2658 = scalar_select %p2657, %s2654, 31
      %s2659 = smul.addr %s2656, 32
      %s2660 = sadd.s32 %s2658, %s2659
      %s2661 = smul.addr %s2660, 4
      %s2662 = scalar_lea.vmem %s9, %s2661
      // Predicated region
      $region57: #{tpu_custom_call.1} parent=55 // pred_check
        %p2663 = pneg %p278
      $region58: #{tpu_custom_call.1} parent=55 // pred_check_branch
        %2665 = sbr.rel (%p2663) target = $region60
      $region59: #{tpu_custom_call.1} parent=55 // pred_region
        %s2666 = smul.u32 8, %s25
      $region60: #{tpu_custom_call.1} parent=55 // pred_fallthru
        _
    $region56: #{tpu_custom_call.1} parent=5 // pred_fallthru
      _
    %p2667 = scmp.le.s32.totalorder 2, %s15
    // Predicated region
    $region61: #{tpu_custom_call.1} parent=5 // pred_check
      %p2668 = pneg %p2667
    $region62: #{tpu_custom_call.1} parent=5 // pred_check_branch
      %2670 = sbr.rel (%p2668) target = $region64
    $region63: #{tpu_custom_call.1} parent=5 // pred_region
      %s2671 = ssub.s32 %s15, 2
      // Predicated region
      $region65: #{tpu_custom_call.1} parent=63 // pred_check
        %p2672 = pneg %p284
      $region66: #{tpu_custom_call.1} parent=63 // pred_check_branch
        %2674 = sbr.rel (%p2672) target = $region68
      $region67: #{tpu_custom_call.1} parent=63 // pred_region
        %s2675 = smul.u32 8, %s27
        %p2676 = scmp.lt.s32.totalorder %s26, 1
        %s2677 = scalar_select %p2676, %s26, 1
        %p2678 = scmp.lt.s32.totalorder %s2675, 31
        %s2679 = scalar_select %p2678, %s2675, 31
        %s2680 = smul.addr %s2677, 32
        %s2681 = sadd.s32 %s2679, %s2680
        %s2682 = smul.addr %s2681, 4
        %s2683 = scalar_lea.vmem %s9, %s2682
      $region68: #{tpu_custom_call.1} parent=63 // pred_fallthru
        _
    $region64: #{tpu_custom_call.1} parent=5 // pred_fallthru
      _
  $region6: #{tpu_custom_call.1} parent=0 // loop_footer
    %s19 = sadd.s32 1, %s15
  $region7: #{tpu_custom_call.1} parent=0 // loop_footer_branch
    %14 = sbr.rel target = $region3
  $region8: #{tpu_custom_call.1} parent=0 // loop_exit
    _

</llo_original>
